<compile_context>
chip_gen: v6e
topology: v6e:2x2x1
jax: 0.10.0
libtpu: 0.0.40
codegen_flags: <defaults>
</compile_context>

<pallas_src>
import functools

import jax
import jax.numpy as jnp
from jax.experimental import pallas as pl
from jax.experimental.pallas import tpu as pltpu

HIDDEN = 128
LANE = 128


def _round_up(v, m):
    return ((v + m - 1) // m) * m


def dqn_kernel(x_ref, w1_ref, b1_ref, w2_ref, b2_ref, w3_ref, b3_ref, o_ref):
    # Layer 1: [bb, inp] @ [inp, 128] + [1, 128] -> ReLU   (bf16 MXU, f32 acc)
    x = x_ref[...].astype(jnp.bfloat16)            # no-op when x is already bf16
    h1 = jnp.dot(x, w1_ref[...], preferred_element_type=jnp.float32)
    h1 = jnp.maximum(h1 + b1_ref[...], 0.0)
    # Layer 2: [bb, 128] @ [128, 128] + [1, 128] -> ReLU
    h2 = jnp.dot(h1.astype(jnp.bfloat16), w2_ref[...],
                 preferred_element_type=jnp.float32)
    h2 = jnp.maximum(h2 + b2_ref[...], 0.0)
    # Layer 3: [bb, 128] @ [128, out_pad] + [1, out_pad]  (lane-dense store)
    o = jnp.dot(h2.astype(jnp.bfloat16), w3_ref[...],
                preferred_element_type=jnp.float32)
    o_ref[...] = (o + b3_ref[...]).astype(o_ref.dtype)


@functools.partial(jax.jit, static_argnames=("block_b", "out_dtype"))
def dqn_forward(x, params, *, block_b=1024, out_dtype=jnp.bfloat16):
    """x: [B, inp] (bf16 preferred). Returns the padded [B, out_pad] Q buffer;
    the real actions live in columns [0, out) — no wrapper slice / HBM pass."""
    w1, b1 = params["w1"], params["b1"]
    w2, b2 = params["w2"], params["b2"]
    w3, b3 = params["w3"], params["b3"]

    B, inp = x.shape
    out_pad = w3.shape[1]

    # Batch tile: multiple of 8 sublanes, big enough that a whole (small/medium)
    # batch is one grid step; large batches still split into >= 4 parallel steps.
    bb = min(block_b, max(8, _round_up(B, 8)))
    grid = (pl.cdiv(B, bb),)   # ragged last block handled by Pallas masking

    # Weights/biases: same block every grid step -> fetched once, VMEM-resident.
    resident = lambda a: pl.BlockSpec(a.shape, lambda i: (0,) * a.ndim)

    flops = 2 * B * (inp * HIDDEN + HIDDEN * HIDDEN + HIDDEN * out_pad)
    bytes_accessed = int(
        x.size * x.dtype.itemsize
        + sum(p.size * p.dtype.itemsize for p in (w1, b1, w2, b2, w3, b3))
        + B * out_pad * jnp.dtype(out_dtype).itemsize)

    out = pl.pallas_call(
        dqn_kernel,
        out_shape=jax.ShapeDtypeStruct((B, out_pad), out_dtype),
        grid=grid,
        in_specs=[
            pl.BlockSpec((bb, inp), lambda i: (i, 0)),   # streamed batch tile
            resident(w1), resident(b1),
            resident(w2), resident(b2),
            resident(w3), resident(b3),
        ],
        out_specs=pl.BlockSpec((bb, out_pad), lambda i: (i, 0)),
        compiler_params=pltpu.CompilerParams(
            dimension_semantics=("parallel",),
        ),
        cost_estimate=pl.CostEstimate(
            flops=flops, transcendentals=0, bytes_accessed=bytes_accessed),
    )(x, w1, b1, w2, b2, w3, b3)

    return out


def init_params(key, inp, out, hidden=HIDDEN):
    """nn.Linear-style init (uniform(-1/sqrt(fan_in), 1/sqrt(fan_in))).
    Weights stored as [in, out] (pre-transposed vs PyTorch's [out, in]),
    cast to bf16 for the MXU; final layer zero-padded to a lane-dense width."""
    ks = jax.random.split(key, 6)
    out_pad = _round_up(max(out, LANE), LANE)

    def lin(kw, kb, fan_in, fan_out, fan_out_pad):
        bound = 1.0 / jnp.sqrt(jnp.float32(fan_in))
        w = jax.random.uniform(kw, (fan_in, fan_out), jnp.float32, -bound, bound)
        b = jax.random.uniform(kb, (1, fan_out), jnp.float32, -bound, bound)
        if fan_out_pad != fan_out:
            w = jnp.pad(w, ((0, 0), (0, fan_out_pad - fan_out)))
            b = jnp.pad(b, ((0, 0), (0, fan_out_pad - fan_out)))
        return w.astype(jnp.bfloat16), b  # bf16 weights, f32 bias

    w1, b1 = lin(ks[0], ks[1], inp, hidden, hidden)
    w2, b2 = lin(ks[2], ks[3], hidden, hidden, hidden)
    w3, b3 = lin(ks[4], ks[5], hidden, out, out_pad)
    return {"w1": w1, "b1": b1, "w2": w2, "b2": b2, "w3": w3, "b3": b3}


def reference_forward(x, params, out_dim, out_dtype=jnp.bfloat16):
    """Pure-JAX reference with identical numerics (bf16 matmul inputs, f32 acc)."""
    h1 = jnp.dot(x.astype(jnp.bfloat16), params["w1"],
                 preferred_element_type=jnp.float32)
    h1 = jnp.maximum(h1 + params["b1"], 0.0)
    h2 = jnp.dot(h1.astype(jnp.bfloat16), params["w2"],
                 preferred_element_type=jnp.float32)
    h2 = jnp.maximum(h2 + params["b2"], 0.0)
    o = jnp.dot(h2.astype(jnp.bfloat16), params["w3"],
                preferred_element_type=jnp.float32)
    return (o + params["b3"]).astype(out_dtype)[:, :out_dim]


if __name__ == "__main__":
    key = jax.random.PRNGKey(0)
    k_param, k_x = jax.random.split(key)

    # DQN-like shapes: obs dim 32, 8 actions, replay-sized batch of 512.
    # bb = 512 -> whole batch is a single grid step (overhead-minimal).
    B, INP, OUT = 512, 32, 8
    params = init_params(k_param, INP, OUT)
    x = jax.random.normal(k_x, (B, INP), jnp.float32).astype(jnp.bfloat16)

    q_padded = dqn_forward(x, params)           # padded (B, 128) bf16 buffer
    q_padded = jax.block_until_ready(q_padded)

    # Correctness check only: slice the real action columns and compare.
    q = q_padded[:, :OUT].astype(jnp.float32)
    q_ref = reference_forward(x, params, OUT).astype(jnp.float32)
    assert q_padded.shape == (B, 128), q_padded.shape
    assert q.shape == (B, OUT), q.shape
    assert jnp.allclose(q, q_ref, atol=3e-2, rtol=3e-2), float(
        jnp.max(jnp.abs(q - q_ref)))

    print("KERNEL_OK")
</pallas_src>

<mosaic_0001>
module attributes {stable_mosaic.version = 11 : i64} {
  func.func @dqn_kernel(%arg0: i32, %arg1: memref<512x32xbf16, #tpu.memory_space<vmem>>, %arg2: memref<32x128xbf16, #tpu.memory_space<vmem>>, %arg3: memref<1x128xf32, #tpu.memory_space<vmem>>, %arg4: memref<128x128xbf16, #tpu.memory_space<vmem>>, %arg5: memref<1x128xf32, #tpu.memory_space<vmem>>, %arg6: memref<128x128xbf16, #tpu.memory_space<vmem>>, %arg7: memref<1x128xf32, #tpu.memory_space<vmem>>, %arg8: memref<512x128xbf16, #tpu.memory_space<vmem>>) attributes {dimension_semantics = [#tpu.dimension_semantics<parallel>], iteration_bounds = array<i64: 1>, scalar_prefetch = 0 : i64, scratch_operands = 0 : i64, tpu.core_type = #tpu.core_type<tc>, window_params = [{transform_indices = @transform_0, window_bounds = array<i64: 512, 32>}, {pipeline_mode = #tpu.pipeline_mode<synchronous>, transform_indices = @transform_1, window_bounds = array<i64: 32, 128>}, {pipeline_mode = #tpu.pipeline_mode<synchronous>, transform_indices = @transform_2, window_bounds = array<i64: 1, 128>}, {pipeline_mode = #tpu.pipeline_mode<synchronous>, transform_indices = @transform_3, window_bounds = array<i64: 128, 128>}, {pipeline_mode = #tpu.pipeline_mode<synchronous>, transform_indices = @transform_4, window_bounds = array<i64: 1, 128>}, {pipeline_mode = #tpu.pipeline_mode<synchronous>, transform_indices = @transform_5, window_bounds = array<i64: 128, 128>}, {pipeline_mode = #tpu.pipeline_mode<synchronous>, transform_indices = @transform_6, window_bounds = array<i64: 1, 128>}, {transform_indices = @transform_7, window_bounds = array<i64: 512, 128>}]} {
    %c0 = arith.constant 0 : index
    %c0_0 = arith.constant 0 : index
    %0 = vector.load %arg1[%c0, %c0_0] : memref<512x32xbf16, #tpu.memory_space<vmem>>, vector<512x32xbf16>
    %c0_1 = arith.constant 0 : index
    %c0_2 = arith.constant 0 : index
    %1 = vector.load %arg2[%c0_1, %c0_2] : memref<32x128xbf16, #tpu.memory_space<vmem>>, vector<32x128xbf16>
    %cst = arith.constant dense<0.000000e+00> : vector<512x128xf32>
    %2 = tpu.matmul %0, %1, %cst {dimension_numbers = #tpu.dot_dimension_numbers<[1], [0], [0], [1], [0, 0, 1, 1], [], []>} : vector<512x32xbf16>, vector<32x128xbf16>, vector<512x128xf32> -> vector<512x128xf32>
    %c0_3 = arith.constant 0 : index
    %c0_4 = arith.constant 0 : index
    %3 = vector.load %arg3[%c0_3, %c0_4] : memref<1x128xf32, #tpu.memory_space<vmem>>, vector<1x128xf32>
    %4 = vector.broadcast %3 : vector<1x128xf32> to vector<512x128xf32>
    %5 = arith.addf %2, %4 : vector<512x128xf32>
    %cst_5 = arith.constant 0.000000e+00 : f32
    %6 = vector.broadcast %cst_5 : f32 to vector<512x128xf32>
    %7 = arith.maximumf %5, %6 : vector<512x128xf32>
    %8 = arith.truncf %7 : vector<512x128xf32> to vector<512x128xbf16>
    %c0_6 = arith.constant 0 : index
    %c0_7 = arith.constant 0 : index
    %9 = vector.load %arg4[%c0_6, %c0_7] : memref<128x128xbf16, #tpu.memory_space<vmem>>, vector<128x128xbf16>
    %cst_8 = arith.constant dense<0.000000e+00> : vector<512x128xf32>
    %10 = tpu.matmul %8, %9, %cst_8 {dimension_numbers = #tpu.dot_dimension_numbers<[1], [0], [0], [1], [0, 0, 1, 1], [], []>} : vector<512x128xbf16>, vector<128x128xbf16>, vector<512x128xf32> -> vector<512x128xf32>
    %c0_9 = arith.constant 0 : index
    %c0_10 = arith.constant 0 : index
    %11 = vector.load %arg5[%c0_9, %c0_10] : memref<1x128xf32, #tpu.memory_space<vmem>>, vector<1x128xf32>
    %12 = vector.broadcast %11 : vector<1x128xf32> to vector<512x128xf32>
    %13 = arith.addf %10, %12 : vector<512x128xf32>
    %cst_11 = arith.constant 0.000000e+00 : f32
    %14 = vector.broadcast %cst_11 : f32 to vector<512x128xf32>
    %15 = arith.maximumf %13, %14 : vector<512x128xf32>
    %16 = arith.truncf %15 : vector<512x128xf32> to vector<512x128xbf16>
    %c0_12 = arith.constant 0 : index
    %c0_13 = arith.constant 0 : index
    %17 = vector.load %arg6[%c0_12, %c0_13] : memref<128x128xbf16, #tpu.memory_space<vmem>>, vector<128x128xbf16>
    %cst_14 = arith.constant dense<0.000000e+00> : vector<512x128xf32>
    %18 = tpu.matmul %16, %17, %cst_14 {dimension_numbers = #tpu.dot_dimension_numbers<[1], [0], [0], [1], [0, 0, 1, 1], [], []>} : vector<512x128xbf16>, vector<128x128xbf16>, vector<512x128xf32> -> vector<512x128xf32>
    %c0_15 = arith.constant 0 : index
    %c0_16 = arith.constant 0 : index
    %19 = vector.load %arg7[%c0_15, %c0_16] : memref<1x128xf32, #tpu.memory_space<vmem>>, vector<1x128xf32>
    %20 = vector.broadcast %19 : vector<1x128xf32> to vector<512x128xf32>
    %21 = arith.addf %18, %20 : vector<512x128xf32>
    %22 = arith.truncf %21 : vector<512x128xf32> to vector<512x128xbf16>
    %c0_17 = arith.constant 0 : index
    %c0_18 = arith.constant 0 : index
    %23 = vector.load %arg8[%c0_17, %c0_18] : memref<512x128xbf16, #tpu.memory_space<vmem>>, vector<512x128xbf16>
    tpu.vector_store %arg8[%c0_17, %c0_18], %22 {strides = array<i32>} : memref<512x128xbf16, #tpu.memory_space<vmem>>, vector<512x128xbf16>,
    return
  }
  func.func @transform_0(%arg0: i32) -> (i32, i32) {
    %c0_i32 = arith.constant 0 : i32
    %c0_i32_0 = arith.constant 0 : i32
    return %arg0, %c0_i32 : i32, i32
  }
  func.func @transform_1(%arg0: i32) -> (i32, i32) {
    %c0_i32 = arith.constant 0 : i32
    %c0_i32_0 = arith.constant 0 : i32
    %c0_i32_1 = arith.constant 0 : i32
    return %c0_i32, %c0_i32_0 : i32, i32
  }
  func.func @transform_2(%arg0: i32) -> (i32, i32) {
    %c0_i32 = arith.constant 0 : i32
    %c0_i32_0 = arith.constant 0 : i32
    %c0_i32_1 = arith.constant 0 : i32
    return %c0_i32, %c0_i32_0 : i32, i32
  }
  func.func @transform_3(%arg0: i32) -> (i32, i32) {
    %c0_i32 = arith.constant 0 : i32
    %c0_i32_0 = arith.constant 0 : i32
    %c0_i32_1 = arith.constant 0 : i32
    return %c0_i32, %c0_i32_0 : i32, i32
  }
  func.func @transform_4(%arg0: i32) -> (i32, i32) {
    %c0_i32 = arith.constant 0 : i32
    %c0_i32_0 = arith.constant 0 : i32
    %c0_i32_1 = arith.constant 0 : i32
    return %c0_i32, %c0_i32_0 : i32, i32
  }
  func.func @transform_5(%arg0: i32) -> (i32, i32) {
    %c0_i32 = arith.constant 0 : i32
    %c0_i32_0 = arith.constant 0 : i32
    %c0_i32_1 = arith.constant 0 : i32
    return %c0_i32, %c0_i32_0 : i32, i32
  }
  func.func @transform_6(%arg0: i32) -> (i32, i32) {
    %c0_i32 = arith.constant 0 : i32
    %c0_i32_0 = arith.constant 0 : i32
    %c0_i32_1 = arith.constant 0 : i32
    return %c0_i32, %c0_i32_0 : i32, i32
  }
  func.func @transform_7(%arg0: i32) -> (i32, i32) {
    %c0_i32 = arith.constant 0 : i32
    %c0_i32_0 = arith.constant 0 : i32
    return %arg0, %c0_i32 : i32, i32
  }
}

</mosaic_0001>

<llo_original>
// kernel: dqn_forward.1
$region0: #{dqn_forward.1}
  #allocation0 [shape = 'u32[]', space=smem, size = 0x4, offset = 0x4, fixed_abs, tag = 'smem constant byte address 0x4 - core index']
  #allocation1 [shape = 'u32[144,128]{1,0:T(1,128)}', space=vmem, size = 0x12000, scoped, tag = 'internal scratch']
  %s0 = inlined_call_operand.vmem [shape: bf16[512,32], index: 0, kind: input, shape index: {}]
  %s1 = inlined_call_operand.vmem [shape: bf16[32,128], index: 1, kind: input, shape index: {}]
  %s2 = inlined_call_operand.vmem [shape: f32[1,128], index: 2, kind: input, shape index: {}]
  %s3 = inlined_call_operand.vmem [shape: bf16[128,128], index: 3, kind: input, shape index: {}]
  %s4 = inlined_call_operand.vmem [shape: f32[1,128], index: 4, kind: input, shape index: {}]
  %s5 = inlined_call_operand.vmem [shape: bf16[128,128], index: 5, kind: input, shape index: {}]
  %s6 = inlined_call_operand.vmem [shape: f32[1,128], index: 6, kind: input, shape index: {}]
  %s7 = inlined_call_operand.hbm [shape: bf16[512,128], index: 7, kind: output, shape index: {}]
  %s8 = sld [smem:[#allocation0]]
  $region38: #{dqn_forward.1} parent=0
    _
  %s10 = ssub.s32 1, %s8
  %s11 = scalar_select 0, %s10, %s8
  $region1: #{dqn_forward.1} parent=0
    #allocation2 [shape = 'u8[131072]{0}', space=vmem, size = 0x20000, scoped, tag = 'output window, operand 0, single buffered']
    #allocation3 [shape = 's32[1]{0}', space=sflag, size = 0x4, scoped, tag = 'scoped memory for dqn_forward.1']
    %12 = vsyncpa [#allocation3], 0
    // Predicated region
    $region2: #{dqn_forward.1} parent=1 // pred_check
      _
    $region3: #{dqn_forward.1} parent=1 // pred_check_branch
      %14 = sbr.rel (0) target = $region5
    $region4: #{dqn_forward.1} parent=1 // pred_region
      _
    $region5: #{dqn_forward.1} parent=1 // pred_fallthru
      _
    // Predicated region
    $region6: #{dqn_forward.1} parent=1 // pred_check
      _
    $region7: #{dqn_forward.1} parent=1 // pred_check_branch
      %16 = sbr.rel (0) target = $region9
    $region8: #{dqn_forward.1} parent=1 // pred_region
      _
    $region9: #{dqn_forward.1} parent=1 // pred_fallthru
      _
    // Predicated region
    $region10: #{dqn_forward.1} parent=1 // pred_check
      _
    $region11: #{dqn_forward.1} parent=1 // pred_check_branch
      %18 = sbr.rel (0) target = $region13
    $region12: #{dqn_forward.1} parent=1 // pred_region
      _
    $region13: #{dqn_forward.1} parent=1 // pred_fallthru
      _
    // Predicated region
    $region14: #{dqn_forward.1} parent=1 // pred_check
      _
    $region15: #{dqn_forward.1} parent=1 // pred_check_branch
      %20 = sbr.rel (0) target = $region17
    $region16: #{dqn_forward.1} parent=1 // pred_region
      _
    $region17: #{dqn_forward.1} parent=1 // pred_fallthru
      _
    // Predicated region
    $region18: #{dqn_forward.1} parent=1 // pred_check
      _
    $region19: #{dqn_forward.1} parent=1 // pred_check_branch
      %22 = sbr.rel (0) target = $region21
    $region20: #{dqn_forward.1} parent=1 // pred_region
      _
    $region21: #{dqn_forward.1} parent=1 // pred_fallthru
      _
    // Predicated region
    $region22: #{dqn_forward.1} parent=1 // pred_check
      _
    $region23: #{dqn_forward.1} parent=1 // pred_check_branch
      %24 = sbr.rel (0) target = $region25
    $region24: #{dqn_forward.1} parent=1 // pred_region
      _
    $region25: #{dqn_forward.1} parent=1 // pred_fallthru
      _
    // Predicated region
    $region26: #{dqn_forward.1} parent=1 // pred_check
      _
    $region27: #{dqn_forward.1} parent=1 // pred_check_branch
      %26 = sbr.rel (0) target = $region29
    $region28: #{dqn_forward.1} parent=1 // pred_region
      _
    $region29: #{dqn_forward.1} parent=1 // pred_fallthru
      _
    %v28 = vld [vmem:[%s0] sm:$0xf]
    %v29 = vld [vmem:[%s0 + $0x4] sm:$0xf]
    %v30 = vld [vmem:[%s0 + $0x8] sm:$0xf]
    %v31 = vld [vmem:[%s0 + $0xc] sm:$0xf]
    %v32 = vld [vmem:[%s0 + $0x10] sm:$0xf]
    %v33 = vld [vmem:[%s0 + $0x14] sm:$0xf]
    %v34 = vld [vmem:[%s0 + $0x18] sm:$0xf]
    %v35 = vld [vmem:[%s0 + $0x1c] sm:$0xf]
    %v36 = vld [vmem:[%s0 + $0x20] sm:$0xf]
    %v37 = vld [vmem:[%s0 + $0x24] sm:$0xf]
    %v38 = vld [vmem:[%s0 + $0x28] sm:$0xf]
    %v39 = vld [vmem:[%s0 + $0x2c] sm:$0xf]
    %v40 = vld [vmem:[%s0 + $0x30] sm:$0xf]
    %v41 = vld [vmem:[%s0 + $0x34] sm:$0xf]
    %v42 = vld [vmem:[%s0 + $0x38] sm:$0xf]
    %v43 = vld [vmem:[%s0 + $0x3c] sm:$0xf]
    %v44 = vld [vmem:[%s0 + $0x40] sm:$0xf]
    %v45 = vld [vmem:[%s0 + $0x44] sm:$0xf]
    %v46 = vld [vmem:[%s0 + $0x48] sm:$0xf]
    %v47 = vld [vmem:[%s0 + $0x4c] sm:$0xf]
    %v48 = vld [vmem:[%s0 + $0x50] sm:$0xf]
    %v49 = vld [vmem:[%s0 + $0x54] sm:$0xf]
    %v50 = vld [vmem:[%s0 + $0x58] sm:$0xf]
    %v51 = vld [vmem:[%s0 + $0x5c] sm:$0xf]
    %v52 = vld [vmem:[%s0 + $0x60] sm:$0xf]
    %v53 = vld [vmem:[%s0 + $0x64] sm:$0xf]
    %v54 = vld [vmem:[%s0 + $0x68] sm:$0xf]
    %v55 = vld [vmem:[%s0 + $0x6c] sm:$0xf]
    %v56 = vld [vmem:[%s0 + $0x70] sm:$0xf]
    %v57 = vld [vmem:[%s0 + $0x74] sm:$0xf]
    %v58 = vld [vmem:[%s0 + $0x78] sm:$0xf]
    %v59 = vld [vmem:[%s0 + $0x7c] sm:$0xf]
    %v60 = vld [vmem:[%s0 + $0x80] sm:$0xf]
    %v61 = vld [vmem:[%s0 + $0x84] sm:$0xf]
    %v62 = vld [vmem:[%s0 + $0x88] sm:$0xf]
    %v63 = vld [vmem:[%s0 + $0x8c] sm:$0xf]
    %v64 = vld [vmem:[%s0 + $0x90] sm:$0xf]
    %v65 = vld [vmem:[%s0 + $0x94] sm:$0xf]
    %v66 = vld [vmem:[%s0 + $0x98] sm:$0xf]
    %v67 = vld [vmem:[%s0 + $0x9c] sm:$0xf]
    %v68 = vld [vmem:[%s0 + $0xa0] sm:$0xf]
    %v69 = vld [vmem:[%s0 + $0xa4] sm:$0xf]
    %v70 = vld [vmem:[%s0 + $0xa8] sm:$0xf]
    %v71 = vld [vmem:[%s0 + $0xac] sm:$0xf]
    %v72 = vld [vmem:[%s0 + $0xb0] sm:$0xf]
    %v73 = vld [vmem:[%s0 + $0xb4] sm:$0xf]
    %v74 = vld [vmem:[%s0 + $0xb8] sm:$0xf]
    %v75 = vld [vmem:[%s0 + $0xbc] sm:$0xf]
    %v76 = vld [vmem:[%s0 + $0xc0] sm:$0xf]
    %v77 = vld [vmem:[%s0 + $0xc4] sm:$0xf]
    %v78 = vld [vmem:[%s0 + $0xc8] sm:$0xf]
    %v79 = vld [vmem:[%s0 + $0xcc] sm:$0xf]
    %v80 = vld [vmem:[%s0 + $0xd0] sm:$0xf]
    %v81 = vld [vmem:[%s0 + $0xd4] sm:$0xf]
    %v82 = vld [vmem:[%s0 + $0xd8] sm:$0xf]
    %v83 = vld [vmem:[%s0 + $0xdc] sm:$0xf]
    %v84 = vld [vmem:[%s0 + $0xe0] sm:$0xf]
    %v85 = vld [vmem:[%s0 + $0xe4] sm:$0xf]
    %v86 = vld [vmem:[%s0 + $0xe8] sm:$0xf]
    %v87 = vld [vmem:[%s0 + $0xec] sm:$0xf]
    %v88 = vld [vmem:[%s0 + $0xf0] sm:$0xf]
    %v89 = vld [vmem:[%s0 + $0xf4] sm:$0xf]
    %v90 = vld [vmem:[%s0 + $0xf8] sm:$0xf]
    %v91 = vld [vmem:[%s0 + $0xfc] sm:$0xf]
    %v92 = vld [vmem:[%s1] sm:$0xf]
    %v93 = vld [vmem:[%s1 + $0x4] sm:$0xf]
    %v94 = vld [vmem:[%s1 + $0x8] sm:$0xf]
    %v95 = vld [vmem:[%s1 + $0xc] sm:$0xf]
    %v96 = vld [vmem:[%s2] sm:$0x1]
    %v98 = vlaneseq
    %v99 = vshrl.u32 %v98, 7
    %v100 = vsub.s32 0, %v99
    %v101 = vrot.slane %v96, %v100
    %v167 = vunpack.c.l.b16 %v28
    %v168 = vunpack.c.l.b16 %v29
    %v169 = vunpack.c.l.b16 %v30
    %v170 = vunpack.c.l.b16 %v31
    %v171 = vunpack.c.l.b16 %v32
    %v172 = vunpack.c.l.b16 %v33
    %v173 = vunpack.c.l.b16 %v34
    %v174 = vunpack.c.l.b16 %v35
    %v175 = vunpack.c.l.b16 %v36
    %v176 = vunpack.c.l.b16 %v37
    %v177 = vunpack.c.l.b16 %v38
    %v178 = vunpack.c.l.b16 %v39
    %v179 = vunpack.c.l.b16 %v40
    %v180 = vunpack.c.l.b16 %v41
    %v181 = vunpack.c.l.b16 %v42
    %v182 = vunpack.c.l.b16 %v43
    %v183 = vunpack.c.l.b16 %v44
    %v184 = vunpack.c.l.b16 %v45
    %v185 = vunpack.c.l.b16 %v46
    %v186 = vunpack.c.l.b16 %v47
    %v187 = vunpack.c.l.b16 %v48
    %v188 = vunpack.c.l.b16 %v49
    %v189 = vunpack.c.l.b16 %v50
    %v190 = vunpack.c.l.b16 %v51
    %v191 = vunpack.c.l.b16 %v52
    %v192 = vunpack.c.l.b16 %v53
    %v193 = vunpack.c.l.b16 %v54
    %v194 = vunpack.c.l.b16 %v55
    %v195 = vunpack.c.l.b16 %v56
    %v196 = vunpack.c.l.b16 %v57
    %v197 = vunpack.c.l.b16 %v58
    %v198 = vunpack.c.l.b16 %v59
    %v199 = vunpack.c.l.b16 %v60
    %v200 = vunpack.c.l.b16 %v61
    %v201 = vunpack.c.l.b16 %v62
    %v202 = vunpack.c.l.b16 %v63
    %v203 = vunpack.c.l.b16 %v64
    %v204 = vunpack.c.l.b16 %v65
    %v205 = vunpack.c.l.b16 %v66
    %v206 = vunpack.c.l.b16 %v67
    %v207 = vunpack.c.l.b16 %v68
    %v208 = vunpack.c.l.b16 %v69
    %v209 = vunpack.c.l.b16 %v70
    %v210 = vunpack.c.l.b16 %v71
    %v211 = vunpack.c.l.b16 %v72
    %v212 = vunpack.c.l.b16 %v73
    %v213 = vunpack.c.l.b16 %v74
    %v214 = vunpack.c.l.b16 %v75
    %v215 = vunpack.c.l.b16 %v76
    %v216 = vunpack.c.l.b16 %v77
    %v217 = vunpack.c.l.b16 %v78
    %v218 = vunpack.c.l.b16 %v79
    %v219 = vunpack.c.l.b16 %v80
    %v220 = vunpack.c.l.b16 %v81
    %v221 = vunpack.c.l.b16 %v82
    %v222 = vunpack.c.l.b16 %v83
    %v223 = vunpack.c.l.b16 %v84
    %v224 = vunpack.c.l.b16 %v85
    %v225 = vunpack.c.l.b16 %v86
    %v226 = vunpack.c.l.b16 %v87
    %v227 = vunpack.c.l.b16 %v88
    %v228 = vunpack.c.l.b16 %v89
    %v229 = vunpack.c.l.b16 %v90
    %v230 = vunpack.c.l.b16 %v91
    %v231 = vpack.c.b16 %v168, %v167
    %v232 = vpack.c.b16 %v170, %v169
    %v233 = vpack.c.b16 %v172, %v171
    %v234 = vpack.c.b16 %v174, %v173
    %v235 = vpack.c.b16 %v176, %v175
    %v236 = vpack.c.b16 %v178, %v177
    %v237 = vpack.c.b16 %v180, %v179
    %v238 = vpack.c.b16 %v182, %v181
    %v239 = vpack.c.b16 %v184, %v183
    %v240 = vpack.c.b16 %v186, %v185
    %v241 = vpack.c.b16 %v188, %v187
    %v242 = vpack.c.b16 %v190, %v189
    %v243 = vpack.c.b16 %v192, %v191
    %v244 = vpack.c.b16 %v194, %v193
    %v245 = vpack.c.b16 %v196, %v195
    %v246 = vpack.c.b16 %v198, %v197
    %v247 = vpack.c.b16 %v200, %v199
    %v248 = vpack.c.b16 %v202, %v201
    %v249 = vpack.c.b16 %v204, %v203
    %v250 = vpack.c.b16 %v206, %v205
    %v251 = vpack.c.b16 %v208, %v207
    %v252 = vpack.c.b16 %v210, %v209
    %v253 = vpack.c.b16 %v212, %v211
    %v254 = vpack.c.b16 %v214, %v213
    %v255 = vpack.c.b16 %v216, %v215
    %v256 = vpack.c.b16 %v218, %v217
    %v257 = vpack.c.b16 %v220, %v219
    %v258 = vpack.c.b16 %v222, %v221
    %v259 = vpack.c.b16 %v224, %v223
    %v260 = vpack.c.b16 %v226, %v225
    %v261 = vpack.c.b16 %v228, %v227
    %v262 = vpack.c.b16 %v230, %v229
    %v267 = vunpack.c.l.b16 %v92
    %v268 = vunpack.c.l.b16 %v93
    %v269 = vunpack.c.l.b16 %v94
    %v270 = vunpack.c.l.b16 %v95
    %v271 = vpack.c.b16 %v268, %v267
    %v272 = vpack.c.b16 %v270, %v269
    %vm275 = vcmask 261120
    %v277 = vsel %vm275, %v231, 0
    %v280 = vsel %vm275, %v232, 0
    %v283 = vsel %vm275, %v233, 0
    %v286 = vsel %vm275, %v234, 0
    %v289 = vsel %vm275, %v235, 0
    %v292 = vsel %vm275, %v236, 0
    %v295 = vsel %vm275, %v237, 0
    %v298 = vsel %vm275, %v238, 0
    %v301 = vsel %vm275, %v239, 0
    %v304 = vsel %vm275, %v240, 0
    %v307 = vsel %vm275, %v241, 0
    %v310 = vsel %vm275, %v242, 0
    %v313 = vsel %vm275, %v243, 0
    %v316 = vsel %vm275, %v244, 0
    %v319 = vsel %vm275, %v245, 0
    %v322 = vsel %vm275, %v246, 0
    %v325 = vsel %vm275, %v247, 0
    %v328 = vsel %vm275, %v248, 0
    %v331 = vsel %vm275, %v249, 0
    %v334 = vsel %vm275, %v250, 0
    %v337 = vsel %vm275, %v251, 0
    %v340 = vsel %vm275, %v252, 0
    %v343 = vsel %vm275, %v253, 0
    %v346 = vsel %vm275, %v254, 0
    %v349 = vsel %vm275, %v255, 0
    %v352 = vsel %vm275, %v256, 0
    %v355 = vsel %vm275, %v257, 0
    %v358 = vsel %vm275, %v258, 0
    %v361 = vsel %vm275, %v259, 0
    %v364 = vsel %vm275, %v260, 0
    %v367 = vsel %vm275, %v261, 0
    %v370 = vsel %vm275, %v262, 0
    %372 = vmatprep.subr.bf16.mxu0 0
    %373 = vmatpush1.bf16.msra.mxu0 0
    %374 = vmatprep.subr.bf16.mxu0 0
    %375 = vmatpush1.bf16.msra.mxu0 0
    %376 = vmatprep.subr.bf16.mxu0 0
    %377 = vmatpush1.bf16.msra.mxu0 0
    %378 = vmatprep.subr.bf16.mxu0 0
    %379 = vmatpush1.bf16.msra.mxu0 0
    %380 = vmatprep.subr.bf16.mxu0 0
    %381 = vmatpush1.bf16.msra.mxu0 0
    %382 = vmatprep.subr.bf16.mxu0 0
    %383 = vmatpush1.bf16.msra.mxu0 0
    %384 = vmatprep.subr.bf16.mxu0 0
    %385 = vmatpush1.bf16.msra.mxu0 %v272
    %386 = vmatprep.subr.bf16.mxu0 0
    %387 = vmatpush1.bf16.msra.mxu0 %v271
    %388 = vmatprep.subr.bf16.mxu0 0
    %389 = vmatpush2.bf16.msra.mxu0 0
    %390 = vmatprep.subr.bf16.mxu0 0
    %391 = vmatpush2.bf16.msra.mxu0 0
    %392 = vmatprep.subr.bf16.mxu0 0
    %393 = vmatpush2.bf16.msra.mxu0 0
    %394 = vmatprep.subr.bf16.mxu0 0
    %395 = vmatpush2.bf16.msra.mxu0 0
    %396 = vmatprep.subr.bf16.mxu0 0
    %397 = vmatpush2.bf16.msra.mxu0 0
    %398 = vmatprep.subr.bf16.mxu0 0
    %399 = vmatpush2.bf16.msra.mxu0 0
    %400 = vmatprep.subr.bf16.mxu0 0
    %401 = vmatpush2.bf16.msra.mxu0 0
    %402 = vmatprep.subr.bf16.mxu0 0
    %403 = vmatpush2.bf16.msra.mxu0 0
    %404 = vmatprep.mubr.bf16.mxu0 0
    %405 = vmatmul.mubr.bf16.gmra.mxu0 %v277
    %v406 = vpop.f32.mrf.mxu0
    %v407 = vadd.f32 %v101, %v406
    %v408 = vpop.f32.mrf.mxu0
    %v409 = vpop.f32.mrf.mxu0
    %v410 = vadd.f32 %v101, %v409
    %v411 = vpop.f32.mrf.mxu0
    %412 = vmatprep.mubr.bf16.mxu0 0
    %413 = vmatmul.mubr.bf16.gmra.mxu0 %v280
    %v414 = vpop.f32.mrf.mxu0
    %v415 = vadd.f32 %v101, %v414
    %v416 = vpop.f32.mrf.mxu0
    %v417 = vpop.f32.mrf.mxu0
    %v418 = vadd.f32 %v101, %v417
    %v419 = vpop.f32.mrf.mxu0
    %420 = vmatprep.mubr.bf16.mxu0 0
    %421 = vmatmul.mubr.bf16.gmra.mxu0 %v283
    %v422 = vpop.f32.mrf.mxu0
    %v423 = vadd.f32 %v101, %v422
    %v424 = vpop.f32.mrf.mxu0
    %v425 = vpop.f32.mrf.mxu0
    %v426 = vadd.f32 %v101, %v425
    %v427 = vpop.f32.mrf.mxu0
    %428 = vmatprep.mubr.bf16.mxu0 0
    %429 = vmatmul.mubr.bf16.gmra.mxu0 %v286
    %v430 = vpop.f32.mrf.mxu0
    %v431 = vadd.f32 %v101, %v430
    %v432 = vpop.f32.mrf.mxu0
    %v433 = vpop.f32.mrf.mxu0
    %v434 = vadd.f32 %v101, %v433
    %v435 = vpop.f32.mrf.mxu0
    %436 = vmatprep.mubr.bf16.mxu0 0
    %437 = vmatmul.mubr.bf16.gmra.mxu0 %v289
    %v438 = vpop.f32.mrf.mxu0
    %v439 = vadd.f32 %v101, %v438
    %v440 = vpop.f32.mrf.mxu0
    %v441 = vpop.f32.mrf.mxu0
    %v442 = vadd.f32 %v101, %v441
    %v443 = vpop.f32.mrf.mxu0
    %444 = vmatprep.mubr.bf16.mxu0 0
    %445 = vmatmul.mubr.bf16.gmra.mxu0 %v292
    %v446 = vpop.f32.mrf.mxu0
    %v447 = vadd.f32 %v101, %v446
    %v448 = vpop.f32.mrf.mxu0
    %v449 = vpop.f32.mrf.mxu0
    %v450 = vadd.f32 %v101, %v449
    %v451 = vpop.f32.mrf.mxu0
    %452 = vmatprep.mubr.bf16.mxu0 0
    %453 = vmatmul.mubr.bf16.gmra.mxu0 %v295
    %v454 = vpop.f32.mrf.mxu0
    %v455 = vadd.f32 %v101, %v454
    %v456 = vpop.f32.mrf.mxu0
    %v457 = vpop.f32.mrf.mxu0
    %v458 = vadd.f32 %v101, %v457
    %v459 = vpop.f32.mrf.mxu0
    %460 = vmatprep.mubr.bf16.mxu0 0
    %461 = vmatmul.mubr.bf16.gmra.mxu0 %v298
    %v462 = vpop.f32.mrf.mxu0
    %v463 = vadd.f32 %v101, %v462
    %v464 = vpop.f32.mrf.mxu0
    %v465 = vpop.f32.mrf.mxu0
    %v466 = vadd.f32 %v101, %v465
    %v467 = vpop.f32.mrf.mxu0
    %468 = vmatprep.mubr.bf16.mxu0 0
    %469 = vmatmul.mubr.bf16.gmra.mxu0 %v301
    %v470 = vpop.f32.mrf.mxu0
    %v471 = vadd.f32 %v101, %v470
    %v472 = vpop.f32.mrf.mxu0
    %v473 = vpop.f32.mrf.mxu0
    %v474 = vadd.f32 %v101, %v473
    %v475 = vpop.f32.mrf.mxu0
    %476 = vmatprep.mubr.bf16.mxu0 0
    %477 = vmatmul.mubr.bf16.gmra.mxu0 %v304
    %v478 = vpop.f32.mrf.mxu0
    %v479 = vadd.f32 %v101, %v478
    %v480 = vpop.f32.mrf.mxu0
    %v481 = vpop.f32.mrf.mxu0
    %v482 = vadd.f32 %v101, %v481
    %v483 = vpop.f32.mrf.mxu0
    %484 = vmatprep.mubr.bf16.mxu0 0
    %485 = vmatmul.mubr.bf16.gmra.mxu0 %v307
    %v486 = vpop.f32.mrf.mxu0
    %v487 = vadd.f32 %v101, %v486
    %v488 = vpop.f32.mrf.mxu0
    %v489 = vpop.f32.mrf.mxu0
    %v490 = vadd.f32 %v101, %v489
    %v491 = vpop.f32.mrf.mxu0
    %492 = vmatprep.mubr.bf16.mxu0 0
    %493 = vmatmul.mubr.bf16.gmra.mxu0 %v310
    %v494 = vpop.f32.mrf.mxu0
    %v495 = vadd.f32 %v101, %v494
    %v496 = vpop.f32.mrf.mxu0
    %v497 = vpop.f32.mrf.mxu0
    %v498 = vadd.f32 %v101, %v497
    %v499 = vpop.f32.mrf.mxu0
    %500 = vmatprep.mubr.bf16.mxu0 0
    %501 = vmatmul.mubr.bf16.gmra.mxu0 %v313
    %v502 = vpop.f32.mrf.mxu0
    %v503 = vadd.f32 %v101, %v502
    %v504 = vpop.f32.mrf.mxu0
    %v505 = vpop.f32.mrf.mxu0
    %v506 = vadd.f32 %v101, %v505
    %v507 = vpop.f32.mrf.mxu0
    %508 = vmatprep.mubr.bf16.mxu0 0
    %509 = vmatmul.mubr.bf16.gmra.mxu0 %v316
    %v510 = vpop.f32.mrf.mxu0
    %v511 = vadd.f32 %v101, %v510
    %v512 = vpop.f32.mrf.mxu0
    %v513 = vpop.f32.mrf.mxu0
    %v514 = vadd.f32 %v101, %v513
    %v515 = vpop.f32.mrf.mxu0
    %516 = vmatprep.mubr.bf16.mxu0 0
    %517 = vmatmul.mubr.bf16.gmra.mxu0 %v319
    %v518 = vpop.f32.mrf.mxu0
    %v519 = vadd.f32 %v101, %v518
    %v520 = vpop.f32.mrf.mxu0
    %v521 = vpop.f32.mrf.mxu0
    %v522 = vadd.f32 %v101, %v521
    %v523 = vpop.f32.mrf.mxu0
    %524 = vmatprep.mubr.bf16.mxu0 0
    %525 = vmatmul.mubr.bf16.gmra.mxu0 %v322
    %v526 = vpop.f32.mrf.mxu0
    %v527 = vadd.f32 %v101, %v526
    %v528 = vpop.f32.mrf.mxu0
    %v529 = vpop.f32.mrf.mxu0
    %v530 = vadd.f32 %v101, %v529
    %v531 = vpop.f32.mrf.mxu0
    %532 = vmatprep.mubr.bf16.mxu0 0
    %533 = vmatmul.mubr.bf16.gmra.mxu0 %v325
    %v534 = vpop.f32.mrf.mxu0
    %v535 = vadd.f32 %v101, %v534
    %v536 = vpop.f32.mrf.mxu0
    %v537 = vpop.f32.mrf.mxu0
    %v538 = vadd.f32 %v101, %v537
    %v539 = vpop.f32.mrf.mxu0
    %540 = vmatprep.mubr.bf16.mxu0 0
    %541 = vmatmul.mubr.bf16.gmra.mxu0 %v328
    %v542 = vpop.f32.mrf.mxu0
    %v543 = vadd.f32 %v101, %v542
    %v544 = vpop.f32.mrf.mxu0
    %v545 = vpop.f32.mrf.mxu0
    %v546 = vadd.f32 %v101, %v545
    %v547 = vpop.f32.mrf.mxu0
    %548 = vmatprep.mubr.bf16.mxu0 0
    %549 = vmatmul.mubr.bf16.gmra.mxu0 %v331
    %v550 = vpop.f32.mrf.mxu0
    %v551 = vadd.f32 %v101, %v550
    %v552 = vpop.f32.mrf.mxu0
    %v553 = vpop.f32.mrf.mxu0
    %v554 = vadd.f32 %v101, %v553
    %v555 = vpop.f32.mrf.mxu0
    %556 = vmatprep.mubr.bf16.mxu0 0
    %557 = vmatmul.mubr.bf16.gmra.mxu0 %v334
    %v558 = vpop.f32.mrf.mxu0
    %v559 = vadd.f32 %v101, %v558
    %v560 = vpop.f32.mrf.mxu0
    %v561 = vpop.f32.mrf.mxu0
    %v562 = vadd.f32 %v101, %v561
    %v563 = vpop.f32.mrf.mxu0
    %564 = vmatprep.mubr.bf16.mxu0 0
    %565 = vmatmul.mubr.bf16.gmra.mxu0 %v337
    %v566 = vpop.f32.mrf.mxu0
    %v567 = vadd.f32 %v101, %v566
    %v568 = vpop.f32.mrf.mxu0
    %v569 = vpop.f32.mrf.mxu0
    %v570 = vadd.f32 %v101, %v569
    %v571 = vpop.f32.mrf.mxu0
    %572 = vmatprep.mubr.bf16.mxu0 0
    %573 = vmatmul.mubr.bf16.gmra.mxu0 %v340
    %v574 = vpop.f32.mrf.mxu0
    %v575 = vadd.f32 %v101, %v574
    %v576 = vpop.f32.mrf.mxu0
    %v577 = vpop.f32.mrf.mxu0
    %v578 = vadd.f32 %v101, %v577
    %v579 = vpop.f32.mrf.mxu0
    %580 = vmatprep.mubr.bf16.mxu0 0
    %581 = vmatmul.mubr.bf16.gmra.mxu0 %v343
    %v582 = vpop.f32.mrf.mxu0
    %v583 = vadd.f32 %v101, %v582
    %v584 = vpop.f32.mrf.mxu0
    %v585 = vpop.f32.mrf.mxu0
    %v586 = vadd.f32 %v101, %v585
    %v587 = vpop.f32.mrf.mxu0
    %588 = vmatprep.mubr.bf16.mxu0 0
    %589 = vmatmul.mubr.bf16.gmra.mxu0 %v346
    %v590 = vpop.f32.mrf.mxu0
    %v591 = vadd.f32 %v101, %v590
    %v592 = vpop.f32.mrf.mxu0
    %v593 = vpop.f32.mrf.mxu0
    %v594 = vadd.f32 %v101, %v593
    %v595 = vpop.f32.mrf.mxu0
    %596 = vmatprep.mubr.bf16.mxu0 0
    %597 = vmatmul.mubr.bf16.gmra.mxu0 %v349
    %v598 = vpop.f32.mrf.mxu0
    %v599 = vadd.f32 %v101, %v598
    %v600 = vpop.f32.mrf.mxu0
    %v601 = vpop.f32.mrf.mxu0
    %v602 = vadd.f32 %v101, %v601
    %v603 = vpop.f32.mrf.mxu0
    %604 = vmatprep.mubr.bf16.mxu0 0
    %605 = vmatmul.mubr.bf16.gmra.mxu0 %v352
    %v606 = vpop.f32.mrf.mxu0
    %v607 = vadd.f32 %v101, %v606
    %v608 = vpop.f32.mrf.mxu0
    %v609 = vpop.f32.mrf.mxu0
    %v610 = vadd.f32 %v101, %v609
    %v611 = vpop.f32.mrf.mxu0
    %612 = vmatprep.mubr.bf16.mxu0 0
    %613 = vmatmul.mubr.bf16.gmra.mxu0 %v355
    %v614 = vpop.f32.mrf.mxu0
    %v615 = vadd.f32 %v101, %v614
    %v616 = vpop.f32.mrf.mxu0
    %v617 = vpop.f32.mrf.mxu0
    %v618 = vadd.f32 %v101, %v617
    %v619 = vpop.f32.mrf.mxu0
    %620 = vmatprep.mubr.bf16.mxu0 0
    %621 = vmatmul.mubr.bf16.gmra.mxu0 %v358
    %v622 = vpop.f32.mrf.mxu0
    %v623 = vadd.f32 %v101, %v622
    %v624 = vpop.f32.mrf.mxu0
    %v625 = vpop.f32.mrf.mxu0
    %v626 = vadd.f32 %v101, %v625
    %v627 = vpop.f32.mrf.mxu0
    %628 = vmatprep.mubr.bf16.mxu0 0
    %629 = vmatmul.mubr.bf16.gmra.mxu0 %v361
    %v630 = vpop.f32.mrf.mxu0
    %v631 = vadd.f32 %v101, %v630
    %v632 = vpop.f32.mrf.mxu0
    %v633 = vpop.f32.mrf.mxu0
    %v634 = vadd.f32 %v101, %v633
    %v635 = vpop.f32.mrf.mxu0
    %636 = vmatprep.mubr.bf16.mxu0 0
    %637 = vmatmul.mubr.bf16.gmra.mxu0 %v364
    %v638 = vpop.f32.mrf.mxu0
    %v639 = vadd.f32 %v101, %v638
    %v640 = vpop.f32.mrf.mxu0
    %v641 = vpop.f32.mrf.mxu0
    %v642 = vadd.f32 %v101, %v641
    %v643 = vpop.f32.mrf.mxu0
    %644 = vmatprep.mubr.bf16.mxu0 0
    %645 = vmatmul.mubr.bf16.gmra.mxu0 %v367
    %v646 = vpop.f32.mrf.mxu0
    %v647 = vadd.f32 %v101, %v646
    %v648 = vpop.f32.mrf.mxu0
    %v649 = vpop.f32.mrf.mxu0
    %v650 = vadd.f32 %v101, %v649
    %v651 = vpop.f32.mrf.mxu0
    %652 = vmatprep.mubr.bf16.mxu0 0
    %653 = vmatmul.mubr.bf16.gmra.mxu0 %v370
    %v654 = vpop.f32.mrf.mxu0
    %v655 = vadd.f32 %v101, %v654
    %v656 = vpop.f32.mrf.mxu0
    %v657 = vpop.f32.mrf.mxu0
    %v658 = vadd.f32 %v101, %v657
    %v659 = vpop.f32.mrf.mxu0
    %660 = vdwg.mxu0
    %v661 = vmax.f32 %v407, 0.0
    %v662 = vmax.f32 %v410, 0.0
    %v663 = vmax.f32 %v415, 0.0
    %v664 = vmax.f32 %v418, 0.0
    %v665 = vmax.f32 %v423, 0.0
    %v666 = vmax.f32 %v426, 0.0
    %v667 = vmax.f32 %v431, 0.0
    %v668 = vmax.f32 %v434, 0.0
    %v669 = vmax.f32 %v439, 0.0
    %v670 = vmax.f32 %v442, 0.0
    %v671 = vmax.f32 %v447, 0.0
    %v672 = vmax.f32 %v450, 0.0
    %v673 = vmax.f32 %v455, 0.0
    %v674 = vmax.f32 %v458, 0.0
    %v675 = vmax.f32 %v463, 0.0
    %v676 = vmax.f32 %v466, 0.0
    %v677 = vmax.f32 %v471, 0.0
    %v678 = vmax.f32 %v474, 0.0
    %v679 = vmax.f32 %v479, 0.0
    %v680 = vmax.f32 %v482, 0.0
    %v681 = vmax.f32 %v487, 0.0
    %v682 = vmax.f32 %v490, 0.0
    %v683 = vmax.f32 %v495, 0.0
    %v684 = vmax.f32 %v498, 0.0
    %v685 = vmax.f32 %v503, 0.0
    %v686 = vmax.f32 %v506, 0.0
    %v687 = vmax.f32 %v511, 0.0
    %v688 = vmax.f32 %v514, 0.0
    %v689 = vmax.f32 %v519, 0.0
    %v690 = vmax.f32 %v522, 0.0
    %v691 = vmax.f32 %v527, 0.0
    %v692 = vmax.f32 %v530, 0.0
    %v693 = vmax.f32 %v535, 0.0
    %v694 = vmax.f32 %v538, 0.0
    %v695 = vmax.f32 %v543, 0.0
    %v696 = vmax.f32 %v546, 0.0
    %v697 = vmax.f32 %v551, 0.0
    %v698 = vmax.f32 %v554, 0.0
    %v699 = vmax.f32 %v559, 0.0
    %v700 = vmax.f32 %v562, 0.0
    %v701 = vmax.f32 %v567, 0.0
    %v702 = vmax.f32 %v570, 0.0
    %v703 = vmax.f32 %v575, 0.0
    %v704 = vmax.f32 %v578, 0.0
    %v705 = vmax.f32 %v583, 0.0
    %v706 = vmax.f32 %v586, 0.0
    %v707 = vmax.f32 %v591, 0.0
    %v708 = vmax.f32 %v594, 0.0
    %v709 = vmax.f32 %v599, 0.0
    %v710 = vmax.f32 %v602, 0.0
    %v711 = vmax.f32 %v607, 0.0
    %v712 = vmax.f32 %v610, 0.0
    %v713 = vmax.f32 %v615, 0.0
    %v714 = vmax.f32 %v618, 0.0
    %v715 = vmax.f32 %v623, 0.0
    %v716 = vmax.f32 %v626, 0.0
    %v717 = vmax.f32 %v631, 0.0
    %v718 = vmax.f32 %v634, 0.0
    %v719 = vmax.f32 %v639, 0.0
    %v720 = vmax.f32 %v642, 0.0
    %v721 = vmax.f32 %v647, 0.0
    %v722 = vmax.f32 %v650, 0.0
    %v723 = vmax.f32 %v655, 0.0
    %v724 = vmax.f32 %v658, 0.0
    %v725 = vpack.c.bf16 %v662, %v661
    %v726 = vpack.c.bf16 %v664, %v663
    %v727 = vpack.c.bf16 %v666, %v665
    %v728 = vpack.c.bf16 %v668, %v667
    %v729 = vpack.c.bf16 %v670, %v669
    %v730 = vpack.c.bf16 %v672, %v671
    %v731 = vpack.c.bf16 %v674, %v673
    %v732 = vpack.c.bf16 %v676, %v675
    %v733 = vpack.c.bf16 %v678, %v677
    %v734 = vpack.c.bf16 %v680, %v679
    %v735 = vpack.c.bf16 %v682, %v681
    %v736 = vpack.c.bf16 %v684, %v683
    %v737 = vpack.c.bf16 %v686, %v685
    %v738 = vpack.c.bf16 %v688, %v687
    %v739 = vpack.c.bf16 %v690, %v689
    %v740 = vpack.c.bf16 %v692, %v691
    %v741 = vpack.c.bf16 %v694, %v693
    %v742 = vpack.c.bf16 %v696, %v695
    %v743 = vpack.c.bf16 %v698, %v697
    %v744 = vpack.c.bf16 %v700, %v699
    %v745 = vpack.c.bf16 %v702, %v701
    %v746 = vpack.c.bf16 %v704, %v703
    %v747 = vpack.c.bf16 %v706, %v705
    %v748 = vpack.c.bf16 %v708, %v707
    %v749 = vpack.c.bf16 %v710, %v709
    %v750 = vpack.c.bf16 %v712, %v711
    %v751 = vpack.c.bf16 %v714, %v713
    %v752 = vpack.c.bf16 %v716, %v715
    %v753 = vpack.c.bf16 %v718, %v717
    %v754 = vpack.c.bf16 %v720, %v719
    %v755 = vpack.c.bf16 %v722, %v721
    %v756 = vpack.c.bf16 %v724, %v723
    %v757 = vld [vmem:[%s3] sm:$0xf]
    %v758 = vld [vmem:[%s3 + $0x4] sm:$0xf]
    %v759 = vld [vmem:[%s3 + $0x8] sm:$0xf]
    %v760 = vld [vmem:[%s3 + $0xc] sm:$0xf]
    %v761 = vld [vmem:[%s3 + $0x10] sm:$0xf]
    %v762 = vld [vmem:[%s3 + $0x14] sm:$0xf]
    %v763 = vld [vmem:[%s3 + $0x18] sm:$0xf]
    %v764 = vld [vmem:[%s3 + $0x1c] sm:$0xf]
    %v765 = vld [vmem:[%s3 + $0x20] sm:$0xf]
    %v766 = vld [vmem:[%s3 + $0x24] sm:$0xf]
    %v767 = vld [vmem:[%s3 + $0x28] sm:$0xf]
    %v768 = vld [vmem:[%s3 + $0x2c] sm:$0xf]
    %v769 = vld [vmem:[%s3 + $0x30] sm:$0xf]
    %v770 = vld [vmem:[%s3 + $0x34] sm:$0xf]
    %v771 = vld [vmem:[%s3 + $0x38] sm:$0xf]
    %v772 = vld [vmem:[%s3 + $0x3c] sm:$0xf]
    %v773 = vld [vmem:[%s4] sm:$0x1]
    %v775 = vlaneseq
    %v776 = vshrl.u32 %v775, 7
    %v777 = vsub.s32 0, %v776
    %v778 = vrot.slane %v773, %v777
    %v796 = vunpack.c.l.b16 %v757
    %v797 = vunpack.c.l.b16 %v758
    %v798 = vunpack.c.l.b16 %v759
    %v799 = vunpack.c.l.b16 %v760
    %v800 = vunpack.c.l.b16 %v761
    %v801 = vunpack.c.l.b16 %v762
    %v802 = vunpack.c.l.b16 %v763
    %v803 = vunpack.c.l.b16 %v764
    %v804 = vunpack.c.l.b16 %v765
    %v805 = vunpack.c.l.b16 %v766
    %v806 = vunpack.c.l.b16 %v767
    %v807 = vunpack.c.l.b16 %v768
    %v808 = vunpack.c.l.b16 %v769
    %v809 = vunpack.c.l.b16 %v770
    %v810 = vunpack.c.l.b16 %v771
    %v811 = vunpack.c.l.b16 %v772
    %v812 = vpack.c.b16 %v797, %v796
    %v813 = vpack.c.b16 %v799, %v798
    %v814 = vpack.c.b16 %v801, %v800
    %v815 = vpack.c.b16 %v803, %v802
    %v816 = vpack.c.b16 %v805, %v804
    %v817 = vpack.c.b16 %v807, %v806
    %v818 = vpack.c.b16 %v809, %v808
    %v819 = vpack.c.b16 %v811, %v810
    %828 = vmatprep.subr.bf16.mxu0 0
    %829 = vmatpush1.bf16.msra.mxu0 %v819
    %830 = vmatprep.subr.bf16.mxu0 0
    %831 = vmatpush1.bf16.msra.mxu0 %v818
    %832 = vmatprep.subr.bf16.mxu0 0
    %833 = vmatpush1.bf16.msra.mxu0 %v817
    %834 = vmatprep.subr.bf16.mxu0 0
    %835 = vmatpush1.bf16.msra.mxu0 %v816
    %836 = vmatprep.subr.bf16.mxu0 0
    %837 = vmatpush1.bf16.msra.mxu0 %v815
    %838 = vmatprep.subr.bf16.mxu0 0
    %839 = vmatpush1.bf16.msra.mxu0 %v814
    %840 = vmatprep.subr.bf16.mxu0 0
    %841 = vmatpush1.bf16.msra.mxu0 %v813
    %842 = vmatprep.subr.bf16.mxu0 0
    %843 = vmatpush1.bf16.msra.mxu0 %v812
    %844 = vmatprep.subr.bf16.mxu0 0
    %845 = vmatpush2.bf16.msra.mxu0 0
    %846 = vmatprep.subr.bf16.mxu0 0
    %847 = vmatpush2.bf16.msra.mxu0 0
    %848 = vmatprep.subr.bf16.mxu0 0
    %849 = vmatpush2.bf16.msra.mxu0 0
    %850 = vmatprep.subr.bf16.mxu0 0
    %851 = vmatpush2.bf16.msra.mxu0 0
    %852 = vmatprep.subr.bf16.mxu0 0
    %853 = vmatpush2.bf16.msra.mxu0 0
    %854 = vmatprep.subr.bf16.mxu0 0
    %855 = vmatpush2.bf16.msra.mxu0 0
    %856 = vmatprep.subr.bf16.mxu0 0
    %857 = vmatpush2.bf16.msra.mxu0 0
    %858 = vmatprep.subr.bf16.mxu0 0
    %859 = vmatpush2.bf16.msra.mxu0 0
    %860 = vmatprep.mubr.bf16.mxu0 0
    %861 = vmatmul.mubr.bf16.gmra.mxu0 %v725
    %v862 = vpop.f32.mrf.mxu0
    %v863 = vadd.f32 %v778, %v862
    %v864 = vpop.f32.mrf.mxu0
    %v865 = vpop.f32.mrf.mxu0
    %v866 = vadd.f32 %v778, %v865
    %v867 = vpop.f32.mrf.mxu0
    %868 = vmatprep.mubr.bf16.mxu0 0
    %869 = vmatmul.mubr.bf16.gmra.mxu0 %v726
    %v870 = vpop.f32.mrf.mxu0
    %v871 = vadd.f32 %v778, %v870
    %v872 = vpop.f32.mrf.mxu0
    %v873 = vpop.f32.mrf.mxu0
    %v874 = vadd.f32 %v778, %v873
    %v875 = vpop.f32.mrf.mxu0
    %876 = vmatprep.mubr.bf16.mxu0 0
    %877 = vmatmul.mubr.bf16.gmra.mxu0 %v727
    %v878 = vpop.f32.mrf.mxu0
    %v879 = vadd.f32 %v778, %v878
    %v880 = vpop.f32.mrf.mxu0
    %v881 = vpop.f32.mrf.mxu0
    %v882 = vadd.f32 %v778, %v881
    %v883 = vpop.f32.mrf.mxu0
    %884 = vmatprep.mubr.bf16.mxu0 0
    %885 = vmatmul.mubr.bf16.gmra.mxu0 %v728
    %v886 = vpop.f32.mrf.mxu0
    %v887 = vadd.f32 %v778, %v886
    %v888 = vpop.f32.mrf.mxu0
    %v889 = vpop.f32.mrf.mxu0
    %v890 = vadd.f32 %v778, %v889
    %v891 = vpop.f32.mrf.mxu0
    %892 = vmatprep.mubr.bf16.mxu0 0
    %893 = vmatmul.mubr.bf16.gmra.mxu0 %v729
    %v894 = vpop.f32.mrf.mxu0
    %v895 = vadd.f32 %v778, %v894
    %v896 = vpop.f32.mrf.mxu0
    %v897 = vpop.f32.mrf.mxu0
    %v898 = vadd.f32 %v778, %v897
    %v899 = vpop.f32.mrf.mxu0
    %900 = vmatprep.mubr.bf16.mxu0 0
    %901 = vmatmul.mubr.bf16.gmra.mxu0 %v730
    %v902 = vpop.f32.mrf.mxu0
    %v903 = vadd.f32 %v778, %v902
    %v904 = vpop.f32.mrf.mxu0
    %v905 = vpop.f32.mrf.mxu0
    %v906 = vadd.f32 %v778, %v905
    %v907 = vpop.f32.mrf.mxu0
    %908 = vmatprep.mubr.bf16.mxu0 0
    %909 = vmatmul.mubr.bf16.gmra.mxu0 %v731
    %v910 = vpop.f32.mrf.mxu0
    %v911 = vadd.f32 %v778, %v910
    %v912 = vpop.f32.mrf.mxu0
    %v913 = vpop.f32.mrf.mxu0
    %v914 = vadd.f32 %v778, %v913
    %v915 = vpop.f32.mrf.mxu0
    %916 = vmatprep.mubr.bf16.mxu0 0
    %917 = vmatmul.mubr.bf16.gmra.mxu0 %v732
    %v918 = vpop.f32.mrf.mxu0
    %v919 = vadd.f32 %v778, %v918
    %v920 = vpop.f32.mrf.mxu0
    %v921 = vpop.f32.mrf.mxu0
    %v922 = vadd.f32 %v778, %v921
    %v923 = vpop.f32.mrf.mxu0
    %924 = vmatprep.mubr.bf16.mxu0 0
    %925 = vmatmul.mubr.bf16.gmra.mxu0 %v733
    %v926 = vpop.f32.mrf.mxu0
    %v927 = vadd.f32 %v778, %v926
    %v928 = vpop.f32.mrf.mxu0
    %v929 = vpop.f32.mrf.mxu0
    %v930 = vadd.f32 %v778, %v929
    %v931 = vpop.f32.mrf.mxu0
    %932 = vmatprep.mubr.bf16.mxu0 0
    %933 = vmatmul.mubr.bf16.gmra.mxu0 %v734
    %v934 = vpop.f32.mrf.mxu0
    %v935 = vadd.f32 %v778, %v934
    %v936 = vpop.f32.mrf.mxu0
    %v937 = vpop.f32.mrf.mxu0
    %v938 = vadd.f32 %v778, %v937
    %v939 = vpop.f32.mrf.mxu0
    %940 = vmatprep.mubr.bf16.mxu0 0
    %941 = vmatmul.mubr.bf16.gmra.mxu0 %v735
    %v942 = vpop.f32.mrf.mxu0
    %v943 = vadd.f32 %v778, %v942
    %v944 = vpop.f32.mrf.mxu0
    %v945 = vpop.f32.mrf.mxu0
    %v946 = vadd.f32 %v778, %v945
    %v947 = vpop.f32.mrf.mxu0
    %948 = vmatprep.mubr.bf16.mxu0 0
    %949 = vmatmul.mubr.bf16.gmra.mxu0 %v736
    %v950 = vpop.f32.mrf.mxu0
    %v951 = vadd.f32 %v778, %v950
    %v952 = vpop.f32.mrf.mxu0
    %v953 = vpop.f32.mrf.mxu0
    %v954 = vadd.f32 %v778, %v953
    %v955 = vpop.f32.mrf.mxu0
    %956 = vmatprep.mubr.bf16.mxu0 0
    %957 = vmatmul.mubr.bf16.gmra.mxu0 %v737
    %v958 = vpop.f32.mrf.mxu0
    %v959 = vadd.f32 %v778, %v958
    %v960 = vpop.f32.mrf.mxu0
    %v961 = vpop.f32.mrf.mxu0
    %v962 = vadd.f32 %v778, %v961
    %v963 = vpop.f32.mrf.mxu0
    %964 = vmatprep.mubr.bf16.mxu0 0
    %965 = vmatmul.mubr.bf16.gmra.mxu0 %v738
    %v966 = vpop.f32.mrf.mxu0
    %v967 = vadd.f32 %v778, %v966
    %v968 = vpop.f32.mrf.mxu0
    %v969 = vpop.f32.mrf.mxu0
    %v970 = vadd.f32 %v778, %v969
    %v971 = vpop.f32.mrf.mxu0
    %972 = vmatprep.mubr.bf16.mxu0 0
    %973 = vmatmul.mubr.bf16.gmra.mxu0 %v739
    %v974 = vpop.f32.mrf.mxu0
    %v975 = vadd.f32 %v778, %v974
    %v976 = vpop.f32.mrf.mxu0
    %v977 = vpop.f32.mrf.mxu0
    %v978 = vadd.f32 %v778, %v977
    %v979 = vpop.f32.mrf.mxu0
    %980 = vmatprep.mubr.bf16.mxu0 0
    %981 = vmatmul.mubr.bf16.gmra.mxu0 %v740
    %v982 = vpop.f32.mrf.mxu0
    %v983 = vadd.f32 %v778, %v982
    %v984 = vpop.f32.mrf.mxu0
    %v985 = vpop.f32.mrf.mxu0
    %v986 = vadd.f32 %v778, %v985
    %v987 = vpop.f32.mrf.mxu0
    %988 = vmatprep.mubr.bf16.mxu0 0
    %989 = vmatmul.mubr.bf16.gmra.mxu0 %v741
    %v990 = vpop.f32.mrf.mxu0
    %v991 = vadd.f32 %v778, %v990
    %v992 = vpop.f32.mrf.mxu0
    %v993 = vpop.f32.mrf.mxu0
    %v994 = vadd.f32 %v778, %v993
    %v995 = vpop.f32.mrf.mxu0
    %996 = vmatprep.mubr.bf16.mxu0 0
    %997 = vmatmul.mubr.bf16.gmra.mxu0 %v742
    %v998 = vpop.f32.mrf.mxu0
    %v999 = vadd.f32 %v778, %v998
    %v1000 = vpop.f32.mrf.mxu0
    %v1001 = vpop.f32.mrf.mxu0
    %v1002 = vadd.f32 %v778, %v1001
    %v1003 = vpop.f32.mrf.mxu0
    %1004 = vmatprep.mubr.bf16.mxu0 0
    %1005 = vmatmul.mubr.bf16.gmra.mxu0 %v743
    %v1006 = vpop.f32.mrf.mxu0
    %v1007 = vadd.f32 %v778, %v1006
    %v1008 = vpop.f32.mrf.mxu0
    %v1009 = vpop.f32.mrf.mxu0
    %v1010 = vadd.f32 %v778, %v1009
    %v1011 = vpop.f32.mrf.mxu0
    %1012 = vmatprep.mubr.bf16.mxu0 0
    %1013 = vmatmul.mubr.bf16.gmra.mxu0 %v744
    %v1014 = vpop.f32.mrf.mxu0
    %v1015 = vadd.f32 %v778, %v1014
    %v1016 = vpop.f32.mrf.mxu0
    %v1017 = vpop.f32.mrf.mxu0
    %v1018 = vadd.f32 %v778, %v1017
    %v1019 = vpop.f32.mrf.mxu0
    %1020 = vmatprep.mubr.bf16.mxu0 0
    %1021 = vmatmul.mubr.bf16.gmra.mxu0 %v745
    %v1022 = vpop.f32.mrf.mxu0
    %v1023 = vadd.f32 %v778, %v1022
    %v1024 = vpop.f32.mrf.mxu0
    %v1025 = vpop.f32.mrf.mxu0
    %v1026 = vadd.f32 %v778, %v1025
    %v1027 = vpop.f32.mrf.mxu0
    %1028 = vmatprep.mubr.bf16.mxu0 0
    %1029 = vmatmul.mubr.bf16.gmra.mxu0 %v746
    %v1030 = vpop.f32.mrf.mxu0
    %v1031 = vadd.f32 %v778, %v1030
    %v1032 = vpop.f32.mrf.mxu0
    %v1033 = vpop.f32.mrf.mxu0
    %v1034 = vadd.f32 %v778, %v1033
    %v1035 = vpop.f32.mrf.mxu0
    %1036 = vmatprep.mubr.bf16.mxu0 0
    %1037 = vmatmul.mubr.bf16.gmra.mxu0 %v747
    %v1038 = vpop.f32.mrf.mxu0
    %v1039 = vadd.f32 %v778, %v1038
    %v1040 = vpop.f32.mrf.mxu0
    %v1041 = vpop.f32.mrf.mxu0
    %v1042 = vadd.f32 %v778, %v1041
    %v1043 = vpop.f32.mrf.mxu0
    %1044 = vmatprep.mubr.bf16.mxu0 0
    %1045 = vmatmul.mubr.bf16.gmra.mxu0 %v748
    %v1046 = vpop.f32.mrf.mxu0
    %v1047 = vadd.f32 %v778, %v1046
    %v1048 = vpop.f32.mrf.mxu0
    %v1049 = vpop.f32.mrf.mxu0
    %v1050 = vadd.f32 %v778, %v1049
    %v1051 = vpop.f32.mrf.mxu0
    %1052 = vmatprep.mubr.bf16.mxu0 0
    %1053 = vmatmul.mubr.bf16.gmra.mxu0 %v749
    %v1054 = vpop.f32.mrf.mxu0
    %v1055 = vadd.f32 %v778, %v1054
    %v1056 = vpop.f32.mrf.mxu0
    %v1057 = vpop.f32.mrf.mxu0
    %v1058 = vadd.f32 %v778, %v1057
    %v1059 = vpop.f32.mrf.mxu0
    %1060 = vmatprep.mubr.bf16.mxu0 0
    %1061 = vmatmul.mubr.bf16.gmra.mxu0 %v750
    %v1062 = vpop.f32.mrf.mxu0
    %v1063 = vadd.f32 %v778, %v1062
    %v1064 = vpop.f32.mrf.mxu0
    %v1065 = vpop.f32.mrf.mxu0
    %v1066 = vadd.f32 %v778, %v1065
    %v1067 = vpop.f32.mrf.mxu0
    %1068 = vmatprep.mubr.bf16.mxu0 0
    %1069 = vmatmul.mubr.bf16.gmra.mxu0 %v751
    %v1070 = vpop.f32.mrf.mxu0
    %v1071 = vadd.f32 %v778, %v1070
    %v1072 = vpop.f32.mrf.mxu0
    %v1073 = vpop.f32.mrf.mxu0
    %v1074 = vadd.f32 %v778, %v1073
    %v1075 = vpop.f32.mrf.mxu0
    %1076 = vmatprep.mubr.bf16.mxu0 0
    %1077 = vmatmul.mubr.bf16.gmra.mxu0 %v752
    %v1078 = vpop.f32.mrf.mxu0
    %v1079 = vadd.f32 %v778, %v1078
    %v1080 = vpop.f32.mrf.mxu0
    %v1081 = vpop.f32.mrf.mxu0
    %v1082 = vadd.f32 %v778, %v1081
    %v1083 = vpop.f32.mrf.mxu0
    %1084 = vmatprep.mubr.bf16.mxu0 0
    %1085 = vmatmul.mubr.bf16.gmra.mxu0 %v753
    %v1086 = vpop.f32.mrf.mxu0
    %v1087 = vadd.f32 %v778, %v1086
    %v1088 = vpop.f32.mrf.mxu0
    %v1089 = vpop.f32.mrf.mxu0
    %v1090 = vadd.f32 %v778, %v1089
    %v1091 = vpop.f32.mrf.mxu0
    %1092 = vmatprep.mubr.bf16.mxu0 0
    %1093 = vmatmul.mubr.bf16.gmra.mxu0 %v754
    %v1094 = vpop.f32.mrf.mxu0
    %v1095 = vadd.f32 %v778, %v1094
    %v1096 = vpop.f32.mrf.mxu0
    %v1097 = vpop.f32.mrf.mxu0
    %v1098 = vadd.f32 %v778, %v1097
    %v1099 = vpop.f32.mrf.mxu0
    %1100 = vmatprep.mubr.bf16.mxu0 0
    %1101 = vmatmul.mubr.bf16.gmra.mxu0 %v755
    %v1102 = vpop.f32.mrf.mxu0
    %v1103 = vadd.f32 %v778, %v1102
    %v1104 = vpop.f32.mrf.mxu0
    %v1105 = vpop.f32.mrf.mxu0
    %v1106 = vadd.f32 %v778, %v1105
    %v1107 = vpop.f32.mrf.mxu0
    %1108 = vmatprep.mubr.bf16.mxu0 0
    %1109 = vmatmul.mubr.bf16.gmra.mxu0 %v756
    %v1110 = vpop.f32.mrf.mxu0
    %v1111 = vadd.f32 %v778, %v1110
    %v1112 = vpop.f32.mrf.mxu0
    %v1113 = vpop.f32.mrf.mxu0
    %v1114 = vadd.f32 %v778, %v1113
    %v1115 = vpop.f32.mrf.mxu0
    %1116 = vdwg.mxu0
    %v1117 = vmax.f32 %v863, 0.0
    %v1118 = vmax.f32 %v866, 0.0
    %v1119 = vmax.f32 %v871, 0.0
    %v1120 = vmax.f32 %v874, 0.0
    %v1121 = vmax.f32 %v879, 0.0
    %v1122 = vmax.f32 %v882, 0.0
    %v1123 = vmax.f32 %v887, 0.0
    %v1124 = vmax.f32 %v890, 0.0
    %v1125 = vmax.f32 %v895, 0.0
    %v1126 = vmax.f32 %v898, 0.0
    %v1127 = vmax.f32 %v903, 0.0
    %v1128 = vmax.f32 %v906, 0.0
    %v1129 = vmax.f32 %v911, 0.0
    %v1130 = vmax.f32 %v914, 0.0
    %v1131 = vmax.f32 %v919, 0.0
    %v1132 = vmax.f32 %v922, 0.0
    %v1133 = vmax.f32 %v927, 0.0
    %v1134 = vmax.f32 %v930, 0.0
    %v1135 = vmax.f32 %v935, 0.0
    %v1136 = vmax.f32 %v938, 0.0
    %v1137 = vmax.f32 %v943, 0.0
    %v1138 = vmax.f32 %v946, 0.0
    %v1139 = vmax.f32 %v951, 0.0
    %v1140 = vmax.f32 %v954, 0.0
    %v1141 = vmax.f32 %v959, 0.0
    %v1142 = vmax.f32 %v962, 0.0
    %v1143 = vmax.f32 %v967, 0.0
    %v1144 = vmax.f32 %v970, 0.0
    %v1145 = vmax.f32 %v975, 0.0
    %v1146 = vmax.f32 %v978, 0.0
    %v1147 = vmax.f32 %v983, 0.0
    %v1148 = vmax.f32 %v986, 0.0
    %v1149 = vmax.f32 %v991, 0.0
    %v1150 = vmax.f32 %v994, 0.0
    %v1151 = vmax.f32 %v999, 0.0
    %v1152 = vmax.f32 %v1002, 0.0
    %v1153 = vmax.f32 %v1007, 0.0
    %v1154 = vmax.f32 %v1010, 0.0
    %v1155 = vmax.f32 %v1015, 0.0
    %v1156 = vmax.f32 %v1018, 0.0
    %v1157 = vmax.f32 %v1023, 0.0
    %v1158 = vmax.f32 %v1026, 0.0
    %v1159 = vmax.f32 %v1031, 0.0
    %v1160 = vmax.f32 %v1034, 0.0
    %v1161 = vmax.f32 %v1039, 0.0
    %v1162 = vmax.f32 %v1042, 0.0
    %v1163 = vmax.f32 %v1047, 0.0
    %v1164 = vmax.f32 %v1050, 0.0
    %v1165 = vmax.f32 %v1055, 0.0
    %v1166 = vmax.f32 %v1058, 0.0
    %v1167 = vmax.f32 %v1063, 0.0
    %v1168 = vmax.f32 %v1066, 0.0
    %v1169 = vmax.f32 %v1071, 0.0
    %v1170 = vmax.f32 %v1074, 0.0
    %v1171 = vmax.f32 %v1079, 0.0
    %v1172 = vmax.f32 %v1082, 0.0
    %v1173 = vmax.f32 %v1087, 0.0
    %v1174 = vmax.f32 %v1090, 0.0
    %v1175 = vmax.f32 %v1095, 0.0
    %v1176 = vmax.f32 %v1098, 0.0
    %v1177 = vmax.f32 %v1103, 0.0
    %v1178 = vmax.f32 %v1106, 0.0
    %v1179 = vmax.f32 %v1111, 0.0
    %v1180 = vmax.f32 %v1114, 0.0
    %v1181 = vpack.c.bf16 %v1118, %v1117
    %v1182 = vpack.c.bf16 %v1120, %v1119
    %v1183 = vpack.c.bf16 %v1122, %v1121
    %v1184 = vpack.c.bf16 %v1124, %v1123
    %v1185 = vpack.c.bf16 %v1126, %v1125
    %v1186 = vpack.c.bf16 %v1128, %v1127
    %v1187 = vpack.c.bf16 %v1130, %v1129
    %v1188 = vpack.c.bf16 %v1132, %v1131
    %v1189 = vpack.c.bf16 %v1134, %v1133
    %v1190 = vpack.c.bf16 %v1136, %v1135
    %v1191 = vpack.c.bf16 %v1138, %v1137
    %v1192 = vpack.c.bf16 %v1140, %v1139
    %v1193 = vpack.c.bf16 %v1142, %v1141
    %v1194 = vpack.c.bf16 %v1144, %v1143
    %v1195 = vpack.c.bf16 %v1146, %v1145
    %v1196 = vpack.c.bf16 %v1148, %v1147
    %v1197 = vpack.c.bf16 %v1150, %v1149
    %v1198 = vpack.c.bf16 %v1152, %v1151
    %v1199 = vpack.c.bf16 %v1154, %v1153
    %v1200 = vpack.c.bf16 %v1156, %v1155
    %v1201 = vpack.c.bf16 %v1158, %v1157
    %v1202 = vpack.c.bf16 %v1160, %v1159
    %v1203 = vpack.c.bf16 %v1162, %v1161
    %v1204 = vpack.c.bf16 %v1164, %v1163
    %v1205 = vpack.c.bf16 %v1166, %v1165
    %v1206 = vpack.c.bf16 %v1168, %v1167
    %v1207 = vpack.c.bf16 %v1170, %v1169
    %v1208 = vpack.c.bf16 %v1172, %v1171
    %v1209 = vpack.c.bf16 %v1174, %v1173
    %v1210 = vpack.c.bf16 %v1176, %v1175
    %v1211 = vpack.c.bf16 %v1178, %v1177
    %v1212 = vpack.c.bf16 %v1180, %v1179
    %v1213 = vld [vmem:[%s5] sm:$0xf]
    %v1214 = vld [vmem:[%s5 + $0x4] sm:$0xf]
    %v1215 = vld [vmem:[%s5 + $0x8] sm:$0xf]
    %v1216 = vld [vmem:[%s5 + $0xc] sm:$0xf]
    %v1217 = vld [vmem:[%s5 + $0x10] sm:$0xf]
    %v1218 = vld [vmem:[%s5 + $0x14] sm:$0xf]
    %v1219 = vld [vmem:[%s5 + $0x18] sm:$0xf]
    %v1220 = vld [vmem:[%s5 + $0x1c] sm:$0xf]
    %v1221 = vld [vmem:[%s5 + $0x20] sm:$0xf]
    %v1222 = vld [vmem:[%s5 + $0x24] sm:$0xf]
    %v1223 = vld [vmem:[%s5 + $0x28] sm:$0xf]
    %v1224 = vld [vmem:[%s5 + $0x2c] sm:$0xf]
    %v1225 = vld [vmem:[%s5 + $0x30] sm:$0xf]
    %v1226 = vld [vmem:[%s5 + $0x34] sm:$0xf]
    %v1227 = vld [vmem:[%s5 + $0x38] sm:$0xf]
    %v1228 = vld [vmem:[%s5 + $0x3c] sm:$0xf]
    %v1229 = vld [vmem:[%s6] sm:$0x1]
    %v1231 = vlaneseq
    %v1232 = vshrl.u32 %v1231, 7
    %v1233 = vsub.s32 0, %v1232
    %v1234 = vrot.slane %v1229, %v1233
    %v1252 = vunpack.c.l.b16 %v1213
    %v1253 = vunpack.c.l.b16 %v1214
    %v1254 = vunpack.c.l.b16 %v1215
    %v1255 = vunpack.c.l.b16 %v1216
    %v1256 = vunpack.c.l.b16 %v1217
    %v1257 = vunpack.c.l.b16 %v1218
    %v1258 = vunpack.c.l.b16 %v1219
    %v1259 = vunpack.c.l.b16 %v1220
    %v1260 = vunpack.c.l.b16 %v1221
    %v1261 = vunpack.c.l.b16 %v1222
    %v1262 = vunpack.c.l.b16 %v1223
    %v1263 = vunpack.c.l.b16 %v1224
    %v1264 = vunpack.c.l.b16 %v1225
    %v1265 = vunpack.c.l.b16 %v1226
    %v1266 = vunpack.c.l.b16 %v1227
    %v1267 = vunpack.c.l.b16 %v1228
    %v1268 = vpack.c.b16 %v1253, %v1252
    %v1269 = vpack.c.b16 %v1255, %v1254
    %v1270 = vpack.c.b16 %v1257, %v1256
    %v1271 = vpack.c.b16 %v1259, %v1258
    %v1272 = vpack.c.b16 %v1261, %v1260
    %v1273 = vpack.c.b16 %v1263, %v1262
    %v1274 = vpack.c.b16 %v1265, %v1264
    %v1275 = vpack.c.b16 %v1267, %v1266
    %1284 = vmatprep.subr.bf16.mxu0 0
    %1285 = vmatpush1.bf16.msra.mxu0 %v1275
    %1286 = vmatprep.subr.bf16.mxu0 0
    %1287 = vmatpush1.bf16.msra.mxu0 %v1274
    %1288 = vmatprep.subr.bf16.mxu0 0
    %1289 = vmatpush1.bf16.msra.mxu0 %v1273
    %1290 = vmatprep.subr.bf16.mxu0 0
    %1291 = vmatpush1.bf16.msra.mxu0 %v1272
    %1292 = vmatprep.subr.bf16.mxu0 0
    %1293 = vmatpush1.bf16.msra.mxu0 %v1271
    %1294 = vmatprep.subr.bf16.mxu0 0
    %1295 = vmatpush1.bf16.msra.mxu0 %v1270
    %1296 = vmatprep.subr.bf16.mxu0 0
    %1297 = vmatpush1.bf16.msra.mxu0 %v1269
    %1298 = vmatprep.subr.bf16.mxu0 0
    %1299 = vmatpush1.bf16.msra.mxu0 %v1268
    %1300 = vmatprep.subr.bf16.mxu0 0
    %1301 = vmatpush2.bf16.msra.mxu0 0
    %1302 = vmatprep.subr.bf16.mxu0 0
    %1303 = vmatpush2.bf16.msra.mxu0 0
    %1304 = vmatprep.subr.bf16.mxu0 0
    %1305 = vmatpush2.bf16.msra.mxu0 0
    %1306 = vmatprep.subr.bf16.mxu0 0
    %1307 = vmatpush2.bf16.msra.mxu0 0
    %1308 = vmatprep.subr.bf16.mxu0 0
    %1309 = vmatpush2.bf16.msra.mxu0 0
    %1310 = vmatprep.subr.bf16.mxu0 0
    %1311 = vmatpush2.bf16.msra.mxu0 0
    %1312 = vmatprep.subr.bf16.mxu0 0
    %1313 = vmatpush2.bf16.msra.mxu0 0
    %1314 = vmatprep.subr.bf16.mxu0 0
    %1315 = vmatpush2.bf16.msra.mxu0 0
    %1316 = vmatprep.mubr.bf16.mxu0 0
    %1317 = vmatmul.mubr.bf16.gmra.mxu0 %v1181
    %v1318 = vpop.f32.mrf.mxu0
    %v1319 = vadd.f32 %v1234, %v1318
    %v1320 = vpop.f32.mrf.mxu0
    %v1321 = vpop.f32.mrf.mxu0
    %v1322 = vadd.f32 %v1234, %v1321
    %v1323 = vpop.f32.mrf.mxu0
    %1324 = vmatprep.mubr.bf16.mxu0 0
    %1325 = vmatmul.mubr.bf16.gmra.mxu0 %v1182
    %v1326 = vpop.f32.mrf.mxu0
    %v1327 = vadd.f32 %v1234, %v1326
    %v1328 = vpop.f32.mrf.mxu0
    %v1329 = vpop.f32.mrf.mxu0
    %v1330 = vadd.f32 %v1234, %v1329
    %v1331 = vpop.f32.mrf.mxu0
    %1332 = vmatprep.mubr.bf16.mxu0 0
    %1333 = vmatmul.mubr.bf16.gmra.mxu0 %v1183
    %v1334 = vpop.f32.mrf.mxu0
    %v1335 = vadd.f32 %v1234, %v1334
    %v1336 = vpop.f32.mrf.mxu0
    %v1337 = vpop.f32.mrf.mxu0
    %v1338 = vadd.f32 %v1234, %v1337
    %v1339 = vpop.f32.mrf.mxu0
    %1340 = vmatprep.mubr.bf16.mxu0 0
    %1341 = vmatmul.mubr.bf16.gmra.mxu0 %v1184
    %v1342 = vpop.f32.mrf.mxu0
    %v1343 = vadd.f32 %v1234, %v1342
    %v1344 = vpop.f32.mrf.mxu0
    %v1345 = vpop.f32.mrf.mxu0
    %v1346 = vadd.f32 %v1234, %v1345
    %v1347 = vpop.f32.mrf.mxu0
    %1348 = vmatprep.mubr.bf16.mxu0 0
    %1349 = vmatmul.mubr.bf16.gmra.mxu0 %v1185
    %v1350 = vpop.f32.mrf.mxu0
    %v1351 = vadd.f32 %v1234, %v1350
    %v1352 = vpop.f32.mrf.mxu0
    %v1353 = vpop.f32.mrf.mxu0
    %v1354 = vadd.f32 %v1234, %v1353
    %v1355 = vpop.f32.mrf.mxu0
    %1356 = vmatprep.mubr.bf16.mxu0 0
    %1357 = vmatmul.mubr.bf16.gmra.mxu0 %v1186
    %v1358 = vpop.f32.mrf.mxu0
    %v1359 = vadd.f32 %v1234, %v1358
    %v1360 = vpop.f32.mrf.mxu0
    %v1361 = vpop.f32.mrf.mxu0
    %v1362 = vadd.f32 %v1234, %v1361
    %v1363 = vpop.f32.mrf.mxu0
    %1364 = vmatprep.mubr.bf16.mxu0 0
    %1365 = vmatmul.mubr.bf16.gmra.mxu0 %v1187
    %v1366 = vpop.f32.mrf.mxu0
    %v1367 = vadd.f32 %v1234, %v1366
    %v1368 = vpop.f32.mrf.mxu0
    %v1369 = vpop.f32.mrf.mxu0
    %v1370 = vadd.f32 %v1234, %v1369
    %v1371 = vpop.f32.mrf.mxu0
    %1372 = vmatprep.mubr.bf16.mxu0 0
    %1373 = vmatmul.mubr.bf16.gmra.mxu0 %v1188
    %v1374 = vpop.f32.mrf.mxu0
    %v1375 = vadd.f32 %v1234, %v1374
    %v1376 = vpop.f32.mrf.mxu0
    %v1377 = vpop.f32.mrf.mxu0
    %v1378 = vadd.f32 %v1234, %v1377
    %v1379 = vpop.f32.mrf.mxu0
    %1380 = vmatprep.mubr.bf16.mxu0 0
    %1381 = vmatmul.mubr.bf16.gmra.mxu0 %v1189
    %v1382 = vpop.f32.mrf.mxu0
    %v1383 = vadd.f32 %v1234, %v1382
    %v1384 = vpop.f32.mrf.mxu0
    %v1385 = vpop.f32.mrf.mxu0
    %v1386 = vadd.f32 %v1234, %v1385
    %v1387 = vpop.f32.mrf.mxu0
    %1388 = vmatprep.mubr.bf16.mxu0 0
    %1389 = vmatmul.mubr.bf16.gmra.mxu0 %v1190
    %v1390 = vpop.f32.mrf.mxu0
    %v1391 = vadd.f32 %v1234, %v1390
    %v1392 = vpop.f32.mrf.mxu0
    %v1393 = vpop.f32.mrf.mxu0
    %v1394 = vadd.f32 %v1234, %v1393
    %v1395 = vpop.f32.mrf.mxu0
    %1396 = vmatprep.mubr.bf16.mxu0 0
    %1397 = vmatmul.mubr.bf16.gmra.mxu0 %v1191
    %v1398 = vpop.f32.mrf.mxu0
    %v1399 = vadd.f32 %v1234, %v1398
    %v1400 = vpop.f32.mrf.mxu0
    %v1401 = vpop.f32.mrf.mxu0
    %v1402 = vadd.f32 %v1234, %v1401
    %v1403 = vpop.f32.mrf.mxu0
    %1404 = vmatprep.mubr.bf16.mxu0 0
    %1405 = vmatmul.mubr.bf16.gmra.mxu0 %v1192
    %v1406 = vpop.f32.mrf.mxu0
    %v1407 = vadd.f32 %v1234, %v1406
    %v1408 = vpop.f32.mrf.mxu0
    %v1409 = vpop.f32.mrf.mxu0
    %v1410 = vadd.f32 %v1234, %v1409
    %v1411 = vpop.f32.mrf.mxu0
    %1412 = vmatprep.mubr.bf16.mxu0 0
    %1413 = vmatmul.mubr.bf16.gmra.mxu0 %v1193
    %v1414 = vpop.f32.mrf.mxu0
    %v1415 = vadd.f32 %v1234, %v1414
    %v1416 = vpop.f32.mrf.mxu0
    %v1417 = vpop.f32.mrf.mxu0
    %v1418 = vadd.f32 %v1234, %v1417
    %v1419 = vpop.f32.mrf.mxu0
    %1420 = vmatprep.mubr.bf16.mxu0 0
    %1421 = vmatmul.mubr.bf16.gmra.mxu0 %v1194
    %v1422 = vpop.f32.mrf.mxu0
    %v1423 = vadd.f32 %v1234, %v1422
    %v1424 = vpop.f32.mrf.mxu0
    %v1425 = vpop.f32.mrf.mxu0
    %v1426 = vadd.f32 %v1234, %v1425
    %v1427 = vpop.f32.mrf.mxu0
    %1428 = vmatprep.mubr.bf16.mxu0 0
    %1429 = vmatmul.mubr.bf16.gmra.mxu0 %v1195
    %v1430 = vpop.f32.mrf.mxu0
    %v1431 = vadd.f32 %v1234, %v1430
    %v1432 = vpop.f32.mrf.mxu0
    %v1433 = vpop.f32.mrf.mxu0
    %v1434 = vadd.f32 %v1234, %v1433
    %v1435 = vpop.f32.mrf.mxu0
    %1436 = vmatprep.mubr.bf16.mxu0 0
    %1437 = vmatmul.mubr.bf16.gmra.mxu0 %v1196
    %v1438 = vpop.f32.mrf.mxu0
    %v1439 = vadd.f32 %v1234, %v1438
    %v1440 = vpop.f32.mrf.mxu0
    %v1441 = vpop.f32.mrf.mxu0
    %v1442 = vadd.f32 %v1234, %v1441
    %v1443 = vpop.f32.mrf.mxu0
    %1444 = vmatprep.mubr.bf16.mxu0 0
    %1445 = vmatmul.mubr.bf16.gmra.mxu0 %v1197
    %v1446 = vpop.f32.mrf.mxu0
    %v1447 = vadd.f32 %v1234, %v1446
    %v1448 = vpop.f32.mrf.mxu0
    %v1449 = vpop.f32.mrf.mxu0
    %v1450 = vadd.f32 %v1234, %v1449
    %v1451 = vpop.f32.mrf.mxu0
    %1452 = vmatprep.mubr.bf16.mxu0 0
    %1453 = vmatmul.mubr.bf16.gmra.mxu0 %v1198
    %v1454 = vpop.f32.mrf.mxu0
    %v1455 = vadd.f32 %v1234, %v1454
    %v1456 = vpop.f32.mrf.mxu0
    %v1457 = vpop.f32.mrf.mxu0
    %v1458 = vadd.f32 %v1234, %v1457
    %v1459 = vpop.f32.mrf.mxu0
    %1460 = vmatprep.mubr.bf16.mxu0 0
    %1461 = vmatmul.mubr.bf16.gmra.mxu0 %v1199
    %v1462 = vpop.f32.mrf.mxu0
    %v1463 = vadd.f32 %v1234, %v1462
    %v1464 = vpop.f32.mrf.mxu0
    %v1465 = vpop.f32.mrf.mxu0
    %v1466 = vadd.f32 %v1234, %v1465
    %v1467 = vpop.f32.mrf.mxu0
    %1468 = vmatprep.mubr.bf16.mxu0 0
    %1469 = vmatmul.mubr.bf16.gmra.mxu0 %v1200
    %v1470 = vpop.f32.mrf.mxu0
    %v1471 = vadd.f32 %v1234, %v1470
    %v1472 = vpop.f32.mrf.mxu0
    %v1473 = vpop.f32.mrf.mxu0
    %v1474 = vadd.f32 %v1234, %v1473
    %v1475 = vpop.f32.mrf.mxu0
    %1476 = vmatprep.mubr.bf16.mxu0 0
    %1477 = vmatmul.mubr.bf16.gmra.mxu0 %v1201
    %v1478 = vpop.f32.mrf.mxu0
    %v1479 = vadd.f32 %v1234, %v1478
    %v1480 = vpop.f32.mrf.mxu0
    %v1481 = vpop.f32.mrf.mxu0
    %v1482 = vadd.f32 %v1234, %v1481
    %v1483 = vpop.f32.mrf.mxu0
    %1484 = vmatprep.mubr.bf16.mxu0 0
    %1485 = vmatmul.mubr.bf16.gmra.mxu0 %v1202
    %v1486 = vpop.f32.mrf.mxu0
    %v1487 = vadd.f32 %v1234, %v1486
    %v1488 = vpop.f32.mrf.mxu0
    %v1489 = vpop.f32.mrf.mxu0
    %v1490 = vadd.f32 %v1234, %v1489
    %v1491 = vpop.f32.mrf.mxu0
    %1492 = vmatprep.mubr.bf16.mxu0 0
    %1493 = vmatmul.mubr.bf16.gmra.mxu0 %v1203
    %v1494 = vpop.f32.mrf.mxu0
    %v1495 = vadd.f32 %v1234, %v1494
    %v1496 = vpop.f32.mrf.mxu0
    %v1497 = vpop.f32.mrf.mxu0
    %v1498 = vadd.f32 %v1234, %v1497
    %v1499 = vpop.f32.mrf.mxu0
    %1500 = vmatprep.mubr.bf16.mxu0 0
    %1501 = vmatmul.mubr.bf16.gmra.mxu0 %v1204
    %v1502 = vpop.f32.mrf.mxu0
    %v1503 = vadd.f32 %v1234, %v1502
    %v1504 = vpop.f32.mrf.mxu0
    %v1505 = vpop.f32.mrf.mxu0
    %v1506 = vadd.f32 %v1234, %v1505
    %v1507 = vpop.f32.mrf.mxu0
    %1508 = vmatprep.mubr.bf16.mxu0 0
    %1509 = vmatmul.mubr.bf16.gmra.mxu0 %v1205
    %v1510 = vpop.f32.mrf.mxu0
    %v1511 = vadd.f32 %v1234, %v1510
    %v1512 = vpop.f32.mrf.mxu0
    %v1513 = vpop.f32.mrf.mxu0
    %v1514 = vadd.f32 %v1234, %v1513
    %v1515 = vpop.f32.mrf.mxu0
    %1516 = vmatprep.mubr.bf16.mxu0 0
    %1517 = vmatmul.mubr.bf16.gmra.mxu0 %v1206
    %v1518 = vpop.f32.mrf.mxu0
    %v1519 = vadd.f32 %v1234, %v1518
    %v1520 = vpop.f32.mrf.mxu0
    %v1521 = vpop.f32.mrf.mxu0
    %v1522 = vadd.f32 %v1234, %v1521
    %v1523 = vpop.f32.mrf.mxu0
    %1524 = vmatprep.mubr.bf16.mxu0 0
    %1525 = vmatmul.mubr.bf16.gmra.mxu0 %v1207
    %v1526 = vpop.f32.mrf.mxu0
    %v1527 = vadd.f32 %v1234, %v1526
    %v1528 = vpop.f32.mrf.mxu0
    %v1529 = vpop.f32.mrf.mxu0
    %v1530 = vadd.f32 %v1234, %v1529
    %v1531 = vpop.f32.mrf.mxu0
    %1532 = vmatprep.mubr.bf16.mxu0 0
    %1533 = vmatmul.mubr.bf16.gmra.mxu0 %v1208
    %v1534 = vpop.f32.mrf.mxu0
    %v1535 = vadd.f32 %v1234, %v1534
    %v1536 = vpop.f32.mrf.mxu0
    %v1537 = vpop.f32.mrf.mxu0
    %v1538 = vadd.f32 %v1234, %v1537
    %v1539 = vpop.f32.mrf.mxu0
    %1540 = vmatprep.mubr.bf16.mxu0 0
    %1541 = vmatmul.mubr.bf16.gmra.mxu0 %v1209
    %v1542 = vpop.f32.mrf.mxu0
    %v1543 = vadd.f32 %v1234, %v1542
    %v1544 = vpop.f32.mrf.mxu0
    %v1545 = vpop.f32.mrf.mxu0
    %v1546 = vadd.f32 %v1234, %v1545
    %v1547 = vpop.f32.mrf.mxu0
    %1548 = vmatprep.mubr.bf16.mxu0 0
    %1549 = vmatmul.mubr.bf16.gmra.mxu0 %v1210
    %v1550 = vpop.f32.mrf.mxu0
    %v1551 = vadd.f32 %v1234, %v1550
    %v1552 = vpop.f32.mrf.mxu0
    %v1553 = vpop.f32.mrf.mxu0
    %v1554 = vadd.f32 %v1234, %v1553
    %v1555 = vpop.f32.mrf.mxu0
    %1556 = vmatprep.mubr.bf16.mxu0 0
    %1557 = vmatmul.mubr.bf16.gmra.mxu0 %v1211
    %v1558 = vpop.f32.mrf.mxu0
    %v1559 = vadd.f32 %v1234, %v1558
    %v1560 = vpop.f32.mrf.mxu0
    %v1561 = vpop.f32.mrf.mxu0
    %v1562 = vadd.f32 %v1234, %v1561
    %v1563 = vpop.f32.mrf.mxu0
    %1564 = vmatprep.mubr.bf16.mxu0 0
    %1565 = vmatmul.mubr.bf16.gmra.mxu0 %v1212
    %v1566 = vpop.f32.mrf.mxu0
    %v1567 = vadd.f32 %v1234, %v1566
    %v1568 = vpop.f32.mrf.mxu0
    %v1569 = vpop.f32.mrf.mxu0
    %v1570 = vadd.f32 %v1234, %v1569
    %v1571 = vpop.f32.mrf.mxu0
    %1572 = vdwg.mxu0
    %v1573 = vpack.c.bf16 %v1322, %v1319
    %v1574 = vpack.c.bf16 %v1330, %v1327
    %v1575 = vpack.c.bf16 %v1338, %v1335
    %v1576 = vpack.c.bf16 %v1346, %v1343
    %v1577 = vpack.c.bf16 %v1354, %v1351
    %v1578 = vpack.c.bf16 %v1362, %v1359
    %v1579 = vpack.c.bf16 %v1370, %v1367
    %v1580 = vpack.c.bf16 %v1378, %v1375
    %v1581 = vpack.c.bf16 %v1386, %v1383
    %v1582 = vpack.c.bf16 %v1394, %v1391
    %v1583 = vpack.c.bf16 %v1402, %v1399
    %v1584 = vpack.c.bf16 %v1410, %v1407
    %v1585 = vpack.c.bf16 %v1418, %v1415
    %v1586 = vpack.c.bf16 %v1426, %v1423
    %v1587 = vpack.c.bf16 %v1434, %v1431
    %v1588 = vpack.c.bf16 %v1442, %v1439
    %v1589 = vpack.c.bf16 %v1450, %v1447
    %v1590 = vpack.c.bf16 %v1458, %v1455
    %v1591 = vpack.c.bf16 %v1466, %v1463
    %v1592 = vpack.c.bf16 %v1474, %v1471
    %v1593 = vpack.c.bf16 %v1482, %v1479
    %v1594 = vpack.c.bf16 %v1490, %v1487
    %v1595 = vpack.c.bf16 %v1498, %v1495
    %v1596 = vpack.c.bf16 %v1506, %v1503
    %v1597 = vpack.c.bf16 %v1514, %v1511
    %v1598 = vpack.c.bf16 %v1522, %v1519
    %v1599 = vpack.c.bf16 %v1530, %v1527
    %v1600 = vpack.c.bf16 %v1538, %v1535
    %v1601 = vpack.c.bf16 %v1546, %v1543
    %v1602 = vpack.c.bf16 %v1554, %v1551
    %v1603 = vpack.c.bf16 %v1562, %v1559
    %v1604 = vpack.c.bf16 %v1570, %v1567
    %v1637 = vunpack.c.l.b16 %v1573
    %v1638 = vunpack.c.h.b16 %v1573
    %v1639 = vunpack.c.l.b16 %v1574
    %v1640 = vunpack.c.h.b16 %v1574
    %v1641 = vunpack.c.l.b16 %v1575
    %v1642 = vunpack.c.h.b16 %v1575
    %v1643 = vunpack.c.l.b16 %v1576
    %v1644 = vunpack.c.h.b16 %v1576
    %v1645 = vunpack.c.l.b16 %v1577
    %v1646 = vunpack.c.h.b16 %v1577
    %v1647 = vunpack.c.l.b16 %v1578
    %v1648 = vunpack.c.h.b16 %v1578
    %v1649 = vunpack.c.l.b16 %v1579
    %v1650 = vunpack.c.h.b16 %v1579
    %v1651 = vunpack.c.l.b16 %v1580
    %v1652 = vunpack.c.h.b16 %v1580
    %v1653 = vunpack.c.l.b16 %v1581
    %v1654 = vunpack.c.h.b16 %v1581
    %v1655 = vunpack.c.l.b16 %v1582
    %v1656 = vunpack.c.h.b16 %v1582
    %v1657 = vunpack.c.l.b16 %v1583
    %v1658 = vunpack.c.h.b16 %v1583
    %v1659 = vunpack.c.l.b16 %v1584
    %v1660 = vunpack.c.h.b16 %v1584
    %v1661 = vunpack.c.l.b16 %v1585
    %v1662 = vunpack.c.h.b16 %v1585
    %v1663 = vunpack.c.l.b16 %v1586
    %v1664 = vunpack.c.h.b16 %v1586
    %v1665 = vunpack.c.l.b16 %v1587
    %v1666 = vunpack.c.h.b16 %v1587
    %v1667 = vunpack.c.l.b16 %v1588
    %v1668 = vunpack.c.h.b16 %v1588
    %v1669 = vunpack.c.l.b16 %v1589
    %v1670 = vunpack.c.h.b16 %v1589
    %v1671 = vunpack.c.l.b16 %v1590
    %v1672 = vunpack.c.h.b16 %v1590
    %v1673 = vunpack.c.l.b16 %v1591
    %v1674 = vunpack.c.h.b16 %v1591
    %v1675 = vunpack.c.l.b16 %v1592
    %v1676 = vunpack.c.h.b16 %v1592
    %v1677 = vunpack.c.l.b16 %v1593
    %v1678 = vunpack.c.h.b16 %v1593
    %v1679 = vunpack.c.l.b16 %v1594
    %v1680 = vunpack.c.h.b16 %v1594
    %v1681 = vunpack.c.l.b16 %v1595
    %v1682 = vunpack.c.h.b16 %v1595
    %v1683 = vunpack.c.l.b16 %v1596
    %v1684 = vunpack.c.h.b16 %v1596
    %v1685 = vunpack.c.l.b16 %v1597
    %v1686 = vunpack.c.h.b16 %v1597
    %v1687 = vunpack.c.l.b16 %v1598
    %v1688 = vunpack.c.h.b16 %v1598
    %v1689 = vunpack.c.l.b16 %v1599
    %v1690 = vunpack.c.h.b16 %v1599
    %v1691 = vunpack.c.l.b16 %v1600
    %v1692 = vunpack.c.h.b16 %v1600
    %v1693 = vunpack.c.l.b16 %v1601
    %v1694 = vunpack.c.h.b16 %v1601
    %v1695 = vunpack.c.l.b16 %v1602
    %v1696 = vunpack.c.h.b16 %v1602
    %v1697 = vunpack.c.l.b16 %v1603
    %v1698 = vunpack.c.h.b16 %v1603
    %v1699 = vunpack.c.l.b16 %v1604
    %v1700 = vunpack.c.h.b16 %v1604
    %v1701 = vpack.c.b16 %v1637, %v1637
    %v1702 = vpack.c.b16 %v1638, %v1638
    %v1703 = vpack.c.b16 %v1639, %v1639
    %v1704 = vpack.c.b16 %v1640, %v1640
    %v1705 = vpack.c.b16 %v1641, %v1641
    %v1706 = vpack.c.b16 %v1642, %v1642
    %v1707 = vpack.c.b16 %v1643, %v1643
    %v1708 = vpack.c.b16 %v1644, %v1644
    %v1709 = vpack.c.b16 %v1645, %v1645
    %v1710 = vpack.c.b16 %v1646, %v1646
    %v1711 = vpack.c.b16 %v1647, %v1647
    %v1712 = vpack.c.b16 %v1648, %v1648
    %v1713 = vpack.c.b16 %v1649, %v1649
    %v1714 = vpack.c.b16 %v1650, %v1650
    %v1715 = vpack.c.b16 %v1651, %v1651
    %v1716 = vpack.c.b16 %v1652, %v1652
    %v1717 = vpack.c.b16 %v1653, %v1653
    %v1718 = vpack.c.b16 %v1654, %v1654
    %v1719 = vpack.c.b16 %v1655, %v1655
    %v1720 = vpack.c.b16 %v1656, %v1656
    %v1721 = vpack.c.b16 %v1657, %v1657
    %v1722 = vpack.c.b16 %v1658, %v1658
    %v1723 = vpack.c.b16 %v1659, %v1659
    %v1724 = vpack.c.b16 %v1660, %v1660
    %v1725 = vpack.c.b16 %v1661, %v1661
    %v1726 = vpack.c.b16 %v1662, %v1662
    %v1727 = vpack.c.b16 %v1663, %v1663
    %v1728 = vpack.c.b16 %v1664, %v1664
    %v1729 = vpack.c.b16 %v1665, %v1665
    %v1730 = vpack.c.b16 %v1666, %v1666
    %v1731 = vpack.c.b16 %v1667, %v1667
    %v1732 = vpack.c.b16 %v1668, %v1668
    %v1733 = vpack.c.b16 %v1669, %v1669
    %v1734 = vpack.c.b16 %v1670, %v1670
    %v1735 = vpack.c.b16 %v1671, %v1671
    %v1736 = vpack.c.b16 %v1672, %v1672
    %v1737 = vpack.c.b16 %v1673, %v1673
    %v1738 = vpack.c.b16 %v1674, %v1674
    %v1739 = vpack.c.b16 %v1675, %v1675
    %v1740 = vpack.c.b16 %v1676, %v1676
    %v1741 = vpack.c.b16 %v1677, %v1677
    %v1742 = vpack.c.b16 %v1678, %v1678
    %v1743 = vpack.c.b16 %v1679, %v1679
    %v1744 = vpack.c.b16 %v1680, %v1680
    %v1745 = vpack.c.b16 %v1681, %v1681
    %v1746 = vpack.c.b16 %v1682, %v1682
    %v1747 = vpack.c.b16 %v1683, %v1683
    %v1748 = vpack.c.b16 %v1684, %v1684
    %v1749 = vpack.c.b16 %v1685, %v1685
    %v1750 = vpack.c.b16 %v1686, %v1686
    %v1751 = vpack.c.b16 %v1687, %v1687
    %v1752 = vpack.c.b16 %v1688, %v1688
    %v1753 = vpack.c.b16 %v1689, %v1689
    %v1754 = vpack.c.b16 %v1690, %v1690
    %v1755 = vpack.c.b16 %v1691, %v1691
    %v1756 = vpack.c.b16 %v1692, %v1692
    %v1757 = vpack.c.b16 %v1693, %v1693
    %v1758 = vpack.c.b16 %v1694, %v1694
    %v1759 = vpack.c.b16 %v1695, %v1695
    %v1760 = vpack.c.b16 %v1696, %v1696
    %v1761 = vpack.c.b16 %v1697, %v1697
    %v1762 = vpack.c.b16 %v1698, %v1698
    %v1763 = vpack.c.b16 %v1699, %v1699
    %v1764 = vpack.c.b16 %v1700, %v1700
    %1829 = vst [vmem:[#allocation2] sm:$0xf] %v1701
    %1830 = vst [vmem:[#allocation2 + $0x4] sm:$0xf] %v1702
    %1831 = vst [vmem:[#allocation2 + $0x8] sm:$0xf] %v1703
    %1832 = vst [vmem:[#allocation2 + $0xc] sm:$0xf] %v1704
    %1833 = vst [vmem:[#allocation2 + $0x10] sm:$0xf] %v1705
    %1834 = vst [vmem:[#allocation2 + $0x14] sm:$0xf] %v1706
    %1835 = vst [vmem:[#allocation2 + $0x18] sm:$0xf] %v1707
    %1836 = vst [vmem:[#allocation2 + $0x1c] sm:$0xf] %v1708
    %1837 = vst [vmem:[#allocation2 + $0x20] sm:$0xf] %v1709
    %1838 = vst [vmem:[#allocation2 + $0x24] sm:$0xf] %v1710
    %1839 = vst [vmem:[#allocation2 + $0x28] sm:$0xf] %v1711
    %1840 = vst [vmem:[#allocation2 + $0x2c] sm:$0xf] %v1712
    %1841 = vst [vmem:[#allocation2 + $0x30] sm:$0xf] %v1713
    %1842 = vst [vmem:[#allocation2 + $0x34] sm:$0xf] %v1714
    %1843 = vst [vmem:[#allocation2 + $0x38] sm:$0xf] %v1715
    %1844 = vst [vmem:[#allocation2 + $0x3c] sm:$0xf] %v1716
    %1845 = vst [vmem:[#allocation2 + $0x40] sm:$0xf] %v1717
    %1846 = vst [vmem:[#allocation2 + $0x44] sm:$0xf] %v1718
    %1847 = vst [vmem:[#allocation2 + $0x48] sm:$0xf] %v1719
    %1848 = vst [vmem:[#allocation2 + $0x4c] sm:$0xf] %v1720
    %1849 = vst [vmem:[#allocation2 + $0x50] sm:$0xf] %v1721
    %1850 = vst [vmem:[#allocation2 + $0x54] sm:$0xf] %v1722
    %1851 = vst [vmem:[#allocation2 + $0x58] sm:$0xf] %v1723
    %1852 = vst [vmem:[#allocation2 + $0x5c] sm:$0xf] %v1724
    %1853 = vst [vmem:[#allocation2 + $0x60] sm:$0xf] %v1725
    %1854 = vst [vmem:[#allocation2 + $0x64] sm:$0xf] %v1726
    %1855 = vst [vmem:[#allocation2 + $0x68] sm:$0xf] %v1727
    %1856 = vst [vmem:[#allocation2 + $0x6c] sm:$0xf] %v1728
    %1857 = vst [vmem:[#allocation2 + $0x70] sm:$0xf] %v1729
    %1858 = vst [vmem:[#allocation2 + $0x74] sm:$0xf] %v1730
    %1859 = vst [vmem:[#allocation2 + $0x78] sm:$0xf] %v1731
    %1860 = vst [vmem:[#allocation2 + $0x7c] sm:$0xf] %v1732
    %1861 = vst [vmem:[#allocation2 + $0x80] sm:$0xf] %v1733
    %1862 = vst [vmem:[#allocation2 + $0x84] sm:$0xf] %v1734
    %1863 = vst [vmem:[#allocation2 + $0x88] sm:$0xf] %v1735
    %1864 = vst [vmem:[#allocation2 + $0x8c] sm:$0xf] %v1736
    %1865 = vst [vmem:[#allocation2 + $0x90] sm:$0xf] %v1737
    %1866 = vst [vmem:[#allocation2 + $0x94] sm:$0xf] %v1738
    %1867 = vst [vmem:[#allocation2 + $0x98] sm:$0xf] %v1739
    %1868 = vst [vmem:[#allocation2 + $0x9c] sm:$0xf] %v1740
    %1869 = vst [vmem:[#allocation2 + $0xa0] sm:$0xf] %v1741
    %1870 = vst [vmem:[#allocation2 + $0xa4] sm:$0xf] %v1742
    %1871 = vst [vmem:[#allocation2 + $0xa8] sm:$0xf] %v1743
    %1872 = vst [vmem:[#allocation2 + $0xac] sm:$0xf] %v1744
    %1873 = vst [vmem:[#allocation2 + $0xb0] sm:$0xf] %v1745
    %1874 = vst [vmem:[#allocation2 + $0xb4] sm:$0xf] %v1746
    %1875 = vst [vmem:[#allocation2 + $0xb8] sm:$0xf] %v1747
    %1876 = vst [vmem:[#allocation2 + $0xbc] sm:$0xf] %v1748
    %1877 = vst [vmem:[#allocation2 + $0xc0] sm:$0xf] %v1749
    %1878 = vst [vmem:[#allocation2 + $0xc4] sm:$0xf] %v1750
    %1879 = vst [vmem:[#allocation2 + $0xc8] sm:$0xf] %v1751
    %1880 = vst [vmem:[#allocation2 + $0xcc] sm:$0xf] %v1752
    %1881 = vst [vmem:[#allocation2 + $0xd0] sm:$0xf] %v1753
    %1882 = vst [vmem:[#allocation2 + $0xd4] sm:$0xf] %v1754
    %1883 = vst [vmem:[#allocation2 + $0xd8] sm:$0xf] %v1755
    %1884 = vst [vmem:[#allocation2 + $0xdc] sm:$0xf] %v1756
    %1885 = vst [vmem:[#allocation2 + $0xe0] sm:$0xf] %v1757
    %1886 = vst [vmem:[#allocation2 + $0xe4] sm:$0xf] %v1758
    %1887 = vst [vmem:[#allocation2 + $0xe8] sm:$0xf] %v1759
    %1888 = vst [vmem:[#allocation2 + $0xec] sm:$0xf] %v1760
    %1889 = vst [vmem:[#allocation2 + $0xf0] sm:$0xf] %v1761
    %1890 = vst [vmem:[#allocation2 + $0xf4] sm:$0xf] %v1762
    %1891 = vst [vmem:[#allocation2 + $0xf8] sm:$0xf] %v1763
    %1892 = vst [vmem:[#allocation2 + $0xfc] sm:$0xf] %v1764
    // Predicated region
    $region30: #{dqn_forward.1} parent=1 // pred_check
      _
    $region31: #{dqn_forward.1} parent=1 // pred_check_branch
      %1894 = sbr.rel (0) target = $region33
    $region32: #{dqn_forward.1} parent=1 // pred_region
      %s1896 = ssub.s32 4096, 4096
      %1897 = vsyncadd [#allocation3], %s1896
      %s1898 = sshll.u32 [#allocation2], 4
      %s1899 = int_to_ptr.vmem [resolvable:$true] %s1898
      %1904 = dma.vmem_to_hbm [thread:$0]  %s1899, 4096, %s7, [#allocation3], 64, 64, 4
    $region33: #{dqn_forward.1} parent=1 // pred_fallthru
      _
    // Predicated region
    $region34: #{dqn_forward.1} parent=1 // pred_check
      _
    $region35: #{dqn_forward.1} parent=1 // pred_check_branch
      %1906 = sbr.rel (0) target = $region37
    $region36: #{dqn_forward.1} parent=1 // pred_region
      %1907 = dma.done [#allocation3], 4096
    $region37: #{dqn_forward.1} parent=1 // pred_fallthru
      _
    %1908 = vsyncpa [#allocation3], 1

</llo_original>
